<compile_context>
chip_gen: v7x
topology: tpu7x:2x2x1
jax: 0.10.0
libtpu: 0.0.40
codegen_flags: <defaults>
</compile_context>

<pallas_src>
import functools
import math

import jax
import jax.numpy as jnp
from jax import lax
from jax.experimental import pallas as pl
from jax.experimental.pallas import tpu as pltpu


def _up_double_conv_kernel(x1_ref, x2_ref, kt_ref, mask_ref, w1_ref, b1_ref,
                           w2_ref, b2_ref, out_ref, m1_ref, m2_ref,
                           *, H, W, NB):
    """One batch chunk (NB elements) per grid step; spatial dims on lanes.

    x1_ref  : (NB, C1, h*w)   low-res input (to be upsampled)
    x2_ref  : (NB, C2, H*W)   skip connection
    kt_ref  : (h*w, H*W)      bilinear (align_corners=True) interp matrix^T
    mask_ref: (9, H*W)        precomputed 0/1 halo masks (one row per tap)
    w1_ref  : (Cmid, 9*Cin)   conv1 weights, im2col layout, BN scale folded in
    b1_ref  : (Cmid, 1)       conv1 folded bias/shift
    w2_ref  : (Cout, 9*Cmid)  conv2 weights (folded)
    b2_ref  : (Cout, 1)
    out_ref : (NB, Cout, H*W) lane-dense output tile
    m1_ref  : (9*Cin, H*W)    VMEM scratch: im2col matrix for conv1
    m2_ref  : (9*Cmid, H*W)   VMEM scratch: im2col matrix for conv2
    """
    HW = H * W
    C1 = x1_ref.shape[1]
    C2 = x2_ref.shape[1]
    Cin = C1 + C2
    Cmid = w1_ref.shape[0]

    offs = [(dy, dx) for dy in (-1, 0, 1) for dx in (-1, 0, 1)]

    # NB is a small static chunk (1 for the tested shapes) -> trivial unroll.
    for nb in range(NB):
        # ---- bilinear 2x upsample (align_corners=True) as one MXU matmul ----
        x1_up = lax.dot_general(x1_ref[nb], kt_ref[...],
                                (((1,), (0,)), ((), ())),
                                preferred_element_type=jnp.float32)   # (C1, HW)
        x2b = x2_ref[nb]                                              # (C2, HW)

        # ---- conv1 im2col: taps written straight from x2 / x1_up ----
        # (channel order inside each tap group matches torch.cat([x2, x1]))
        for k, (dy, dx) in enumerate(offs):
            s = dy * W + dx                       # flat shift for tap (dy, dx)
            msk = mask_ref[k:k + 1, :]            # (1, HW) 0/1 halo mask
            t2 = x2b if s == 0 else pltpu.roll(x2b, shift=(-s) % HW, axis=1)
            t1 = x1_up if s == 0 else pltpu.roll(x1_up, shift=(-s) % HW, axis=1)
            m1_ref[k * Cin:k * Cin + C2, :] = t2 * msk
            m1_ref[k * Cin + C2:(k + 1) * Cin, :] = t1 * msk

        # ---- conv1 (+ folded BN) + ReLU: single matmul, K = 9*Cin ----
        h1 = lax.dot_general(w1_ref[...], m1_ref[...],
                             (((1,), (0,)), ((), ())),
                             preferred_element_type=jnp.float32)      # (Cmid,HW)
        mid = jnp.maximum(h1 + b1_ref[...], 0.0)

        # ---- conv2 im2col ----
        for k, (dy, dx) in enumerate(offs):
            s = dy * W + dx
            msk = mask_ref[k:k + 1, :]
            t = mid if s == 0 else pltpu.roll(mid, shift=(-s) % HW, axis=1)
            m2_ref[k * Cmid:(k + 1) * Cmid, :] = t * msk

        # ---- conv2 (+ folded BN) + ReLU: single matmul, K = 9*Cmid ----
        h2 = lax.dot_general(w2_ref[...], m2_ref[...],
                             (((1,), (0,)), ((), ())),
                             preferred_element_type=jnp.float32)      # (Cout,HW)
        out_ref[nb] = jnp.maximum(h2 + b2_ref[...], 0.0).astype(out_ref.dtype)


def up_double_conv_pallas(x1, x2, kt, masks, w1m, b1c, w2m, b2c):
    """x1: (N, C1, h, w), x2: (N, C2, H, W) with H=2h, W=2w. NCHW float32."""
    N, C1, h, w = x1.shape
    _, C2, H, W = x2.shape
    hw, HW = h * w, H * W
    Cin = C1 + C2
    Cmid = w1m.shape[0]
    Cout = w2m.shape[0]

    # ceil(N/G) "fat" grid steps: G=2 keeps both v7x TCs busy; on single-TC
    # chips fewer, fatter steps amortize the per-step grid overhead.
    G = 2 if (N % 2 == 0 and N >= 2) else 1
    NB = N // G

    # Free reshapes (merge contiguous trailing dims): no transpose, no pad.
    x1f = x1.reshape(N, C1, hw)
    x2f = x2.reshape(N, C2, HW)

    flops = 2 * N * HW * (C1 * hw + Cmid * 9 * Cin + Cout * 9 * Cmid)
    bytes_accessed = 4 * (x1f.size + x2f.size + N * Cout * HW
                          + kt.size + masks.size + w1m.size + b1c.size
                          + w2m.size + b2c.size)

    out_flat = pl.pallas_call(
        functools.partial(_up_double_conv_kernel, H=H, W=W, NB=NB),
        out_shape=jax.ShapeDtypeStruct((N, Cout, HW), jnp.float32),
        grid=(G,),
        in_specs=[
            pl.BlockSpec((NB, C1, hw), lambda g: (g, 0, 0)),
            pl.BlockSpec((NB, C2, HW), lambda g: (g, 0, 0)),
            pl.BlockSpec((hw, HW), lambda g: (0, 0)),
            pl.BlockSpec((9, HW), lambda g: (0, 0)),
            pl.BlockSpec((Cmid, 9 * Cin), lambda g: (0, 0)),
            pl.BlockSpec((Cmid, 1), lambda g: (0, 0)),
            pl.BlockSpec((Cout, 9 * Cmid), lambda g: (0, 0)),
            pl.BlockSpec((Cout, 1), lambda g: (0, 0)),
        ],
        out_specs=pl.BlockSpec((NB, Cout, HW), lambda g: (g, 0, 0)),
        scratch_shapes=[
            pltpu.VMEM((9 * Cin, HW), jnp.float32),   # im2col for conv1
            pltpu.VMEM((9 * Cmid, HW), jnp.float32),  # im2col for conv2
        ],
        compiler_params=pltpu.CompilerParams(
            dimension_semantics=("parallel",)),
        cost_estimate=pl.CostEstimate(flops=flops, transcendentals=0,
                                      bytes_accessed=bytes_accessed),
    )(x1f, x2f, kt, masks, w1m, b1c, w2m, b2c)

    return out_flat.reshape(N, Cout, H, W)


# ----------------------------- wrapper-side prep -----------------------------

def _bilinear_matrix(out_size, in_size):
    """1-D interpolation matrix of nn.Upsample(bilinear, align_corners=True)."""
    if in_size == 1:
        return jnp.ones((out_size, 1), jnp.float32)
    src = jnp.arange(out_size, dtype=jnp.float32) * (
        (in_size - 1) / (out_size - 1))
    lo = jnp.clip(jnp.floor(src).astype(jnp.int32), 0, in_size - 2)
    frac = src - lo.astype(jnp.float32)
    cols = jnp.arange(in_size, dtype=jnp.int32)[None, :]
    w_lo = jnp.where(cols == lo[:, None], 1.0 - frac[:, None], 0.0)
    w_hi = jnp.where(cols == (lo + 1)[:, None], frac[:, None], 0.0)
    return (w_lo + w_hi).astype(jnp.float32)


def _halo_masks(H, W):
    """(9, H*W) 0/1 masks for the 9 taps of a 3x3 'SAME' zero-padded conv."""
    p = jnp.arange(H * W, dtype=jnp.int32)
    row = p // W
    col = p % W
    masks = []
    for dy in (-1, 0, 1):
        for dx in (-1, 0, 1):
            v = ((row + dy >= 0) & (row + dy < H) &
                 (col + dx >= 0) & (col + dx < W))
            masks.append(v)
    return jnp.stack(masks, axis=0).astype(jnp.float32)


def _fold_conv_bn(w_hwio, conv_b, gamma, beta, rmean, rvar, eps):
    """Fold conv bias + inference BN into (Cout, 9*Cin) weights, (Cout, 1) bias."""
    kh, kw, cin, cout = w_hwio.shape
    scale = gamma / jnp.sqrt(rvar + eps)                          # (Cout,)
    wmat = jnp.transpose(w_hwio.reshape(kh * kw * cin, cout))     # (Cout, 9*Cin)
    wmat = wmat * scale[:, None]
    bias = (beta + scale * (conv_b - rmean)).reshape(cout, 1)
    return wmat, bias


def _reference(x1, x2, Ah, Aw, w1, cb1, g1, be1, rm1, rv1,
               w2, cb2, g2, be2, rm2, rv2, eps):
    """Pure-JAX reference of Up.forward (inference-mode BN)."""
    x1_up = jnp.einsum('Oy,ncyx,Xx->ncOX', Ah, x1, Aw)            # bilinear, ac=True
    x = jnp.concatenate([x2, x1_up], axis=1)                      # NCHW concat
    xh = jnp.transpose(x, (0, 2, 3, 1))
    dn = ('NHWC', 'HWIO', 'NHWC')
    y = lax.conv_general_dilated(xh, w1, (1, 1), 'SAME', dimension_numbers=dn) + cb1
    y = (y - rm1) / jnp.sqrt(rv1 + eps) * g1 + be1
    y = jnp.maximum(y, 0.0)
    y = lax.conv_general_dilated(y, w2, (1, 1), 'SAME', dimension_numbers=dn) + cb2
    y = (y - rm2) / jnp.sqrt(rv2 + eps) * g2 + be2
    y = jnp.maximum(y, 0.0)
    return jnp.transpose(y, (0, 3, 1, 2))


if __name__ == "__main__":
    # Up(in_channels=4, out_channels=8): deep feature x1 has 2 channels
    # (upsampled 8x8 -> 16x16), skip x2 has 2 channels at 16x16.
    N = 2
    C1, C2 = 2, 2
    Cin = C1 + C2            # 4
    Cout = 8
    Cmid = Cout // 2         # 4
    h = w = 8
    H, W = 2 * h, 2 * w      # 16, 16
    eps = 1e-5

    key = jax.random.PRNGKey(0)
    keys = jax.random.split(key, 14)

    x1 = jax.random.normal(keys[0], (N, C1, h, w), jnp.float32)
    x2 = jax.random.normal(keys[1], (N, C2, H, W), jnp.float32)

    # conv weights (HWIO), conv biases, BN params (running stats).
    w1 = jax.random.normal(keys[2], (3, 3, Cin, Cmid), jnp.float32) * 0.2
    cb1 = jax.random.normal(keys[3], (Cmid,), jnp.float32) * 0.1
    g1 = 1.0 + 0.1 * jax.random.normal(keys[4], (Cmid,), jnp.float32)
    be1 = 0.1 * jax.random.normal(keys[5], (Cmid,), jnp.float32)
    rm1 = 0.1 * jax.random.normal(keys[6], (Cmid,), jnp.float32)
    rv1 = jax.random.uniform(keys[7], (Cmid,), jnp.float32, 0.5, 1.5)

    w2 = jax.random.normal(keys[8], (3, 3, Cmid, Cout), jnp.float32) * 0.2
    cb2 = jax.random.normal(keys[9], (Cout,), jnp.float32) * 0.1
    g2 = 1.0 + 0.1 * jax.random.normal(keys[10], (Cout,), jnp.float32)
    be2 = 0.1 * jax.random.normal(keys[11], (Cout,), jnp.float32)
    rm2 = 0.1 * jax.random.normal(keys[12], (Cout,), jnp.float32)
    rv2 = jax.random.uniform(keys[13], (Cout,), jnp.float32, 0.5, 1.5)

    # One-time wrapper-side parameter prep (amortized over the batch).
    Ah = _bilinear_matrix(H, h)                      # (H, h)
    Aw = _bilinear_matrix(W, w)                      # (W, w)
    kt = jnp.transpose(jnp.kron(Ah, Aw))             # (h*w, H*W)
    masks = _halo_masks(H, W)                        # (9, H*W) grid-invariant
    w1m, b1c = _fold_conv_bn(w1, cb1, g1, be1, rm1, rv1, eps)
    w2m, b2c = _fold_conv_bn(w2, cb2, g2, be2, rm2, rv2, eps)

    out = up_double_conv_pallas(x1, x2, kt, masks, w1m, b1c, w2m, b2c)
    out = jax.block_until_ready(out)

    ref = _reference(x1, x2, Ah, Aw, w1, cb1, g1, be1, rm1, rv1,
                     w2, cb2, g2, be2, rm2, rv2, eps)
    ref = jax.block_until_ready(ref)

    assert out.shape == (N, Cout, H, W), out.shape
    if not jnp.allclose(out, ref, atol=1e-3, rtol=1e-3):
        err = float(jnp.max(jnp.abs(out - ref)))
        raise AssertionError(f"Pallas Up/DoubleConv mismatch vs reference: {err}")

    print("KERNEL_OK")
</pallas_src>

<mosaic_0001>
module attributes {stable_mosaic.version = 11 : i64} {
  func.func @_up_double_conv_kernel(%arg0: i32, %arg1: memref<1x2x64xf32, #tpu.memory_space<vmem>>, %arg2: memref<1x2x256xf32, #tpu.memory_space<vmem>>, %arg3: memref<64x256xf32, #tpu.memory_space<vmem>>, %arg4: memref<9x256xf32, #tpu.memory_space<vmem>>, %arg5: memref<4x36xf32, #tpu.memory_space<vmem>>, %arg6: memref<4x1xf32, #tpu.memory_space<vmem>>, %arg7: memref<8x36xf32, #tpu.memory_space<vmem>>, %arg8: memref<8x1xf32, #tpu.memory_space<vmem>>, %arg9: memref<1x8x256xf32, #tpu.memory_space<vmem>>, %arg10: memref<36x256xf32, #tpu.memory_space<vmem>>, %arg11: memref<36x256xf32, #tpu.memory_space<vmem>>) attributes {dimension_semantics = [#tpu.dimension_semantics<parallel>], iteration_bounds = array<i64: 2>, scalar_prefetch = 0 : i64, scratch_operands = 2 : i64, tpu.core_type = #tpu.core_type<tc>, window_params = [{transform_indices = @transform_0, window_bounds = array<i64: 1, 2, 64>}, {transform_indices = @transform_1, window_bounds = array<i64: 1, 2, 256>}, {pipeline_mode = #tpu.pipeline_mode<synchronous>, transform_indices = @transform_2, window_bounds = array<i64: 64, 256>}, {pipeline_mode = #tpu.pipeline_mode<synchronous>, transform_indices = @transform_3, window_bounds = array<i64: 9, 256>}, {pipeline_mode = #tpu.pipeline_mode<synchronous>, transform_indices = @transform_4, window_bounds = array<i64: 4, 36>}, {pipeline_mode = #tpu.pipeline_mode<synchronous>, transform_indices = @transform_5, window_bounds = array<i64: 4, 1>}, {pipeline_mode = #tpu.pipeline_mode<synchronous>, transform_indices = @transform_6, window_bounds = array<i64: 8, 36>}, {pipeline_mode = #tpu.pipeline_mode<synchronous>, transform_indices = @transform_7, window_bounds = array<i64: 8, 1>}, {transform_indices = @transform_8, window_bounds = array<i64: 1, 8, 256>}]} {
    %c0 = arith.constant 0 : index
    %c0_0 = arith.constant 0 : index
    %c0_1 = arith.constant 0 : index
    %0 = vector.load %arg1[%c0, %c0_0, %c0_1] : memref<1x2x64xf32, #tpu.memory_space<vmem>>, vector<1x2x64xf32>
    %1 = vector.shape_cast %0 : vector<1x2x64xf32> to vector<2x64xf32>
    %c0_2 = arith.constant 0 : index
    %c0_3 = arith.constant 0 : index
    %2 = vector.load %arg3[%c0_2, %c0_3] : memref<64x256xf32, #tpu.memory_space<vmem>>, vector<64x256xf32>
    %cst = arith.constant dense<0.000000e+00> : vector<2x256xf32>
    %3 = tpu.matmul %1, %2, %cst {dimension_numbers = #tpu.dot_dimension_numbers<[1], [0], [0], [1], [0, 0, 1, 1], [], []>} : vector<2x64xf32>, vector<64x256xf32>, vector<2x256xf32> -> vector<2x256xf32>
    %c0_4 = arith.constant 0 : index
    %c0_5 = arith.constant 0 : index
    %c0_6 = arith.constant 0 : index
    %4 = vector.load %arg2[%c0_4, %c0_5, %c0_6] : memref<1x2x256xf32, #tpu.memory_space<vmem>>, vector<1x2x256xf32>
    %5 = vector.shape_cast %4 : vector<1x2x256xf32> to vector<2x256xf32>
    %c0_7 = arith.constant 0 : index
    %c0_8 = arith.constant 0 : index
    %6 = vector.load %arg4[%c0_7, %c0_8] : memref<9x256xf32, #tpu.memory_space<vmem>>, vector<1x256xf32>
    %c17_i32 = arith.constant 17 : i32
    %7 = tpu.dynamic_rotate %5 by %c17_i32 dim 1 : vector<2x256xf32>, i32 -> vector<2x256xf32>
    %c17_i32_9 = arith.constant 17 : i32
    %8 = tpu.dynamic_rotate %3 by %c17_i32_9 dim 1 : vector<2x256xf32>, i32 -> vector<2x256xf32>
    %9 = vector.broadcast %6 : vector<1x256xf32> to vector<2x256xf32>
    %10 = arith.mulf %7, %9 : vector<2x256xf32>
    %c0_10 = arith.constant 0 : index
    %c0_11 = arith.constant 0 : index
    %11 = vector.load %arg10[%c0_10, %c0_11] : memref<36x256xf32, #tpu.memory_space<vmem>>, vector<2x256xf32>
    tpu.vector_store %arg10[%c0_10, %c0_11], %10 {strides = array<i32>} : memref<36x256xf32, #tpu.memory_space<vmem>>, vector<2x256xf32>,
    %12 = vector.broadcast %6 : vector<1x256xf32> to vector<2x256xf32>
    %13 = arith.mulf %8, %12 : vector<2x256xf32>
    %c2 = arith.constant 2 : index
    %c0_12 = arith.constant 0 : index
    %14 = vector.load %arg10[%c2, %c0_12] : memref<36x256xf32, #tpu.memory_space<vmem>>, vector<2x256xf32>
    tpu.vector_store %arg10[%c2, %c0_12], %13 {strides = array<i32>} : memref<36x256xf32, #tpu.memory_space<vmem>>, vector<2x256xf32>,
    %c1 = arith.constant 1 : index
    %c0_13 = arith.constant 0 : index
    %15 = vector.load %arg4[%c1, %c0_13] : memref<9x256xf32, #tpu.memory_space<vmem>>, vector<1x256xf32>
    %c16_i32 = arith.constant 16 : i32
    %16 = tpu.dynamic_rotate %5 by %c16_i32 dim 1 : vector<2x256xf32>, i32 -> vector<2x256xf32>
    %c16_i32_14 = arith.constant 16 : i32
    %17 = tpu.dynamic_rotate %3 by %c16_i32_14 dim 1 : vector<2x256xf32>, i32 -> vector<2x256xf32>
    %18 = vector.broadcast %15 : vector<1x256xf32> to vector<2x256xf32>
    %19 = arith.mulf %16, %18 : vector<2x256xf32>
    %c4 = arith.constant 4 : index
    %c0_15 = arith.constant 0 : index
    %20 = vector.load %arg10[%c4, %c0_15] : memref<36x256xf32, #tpu.memory_space<vmem>>, vector<2x256xf32>
    tpu.vector_store %arg10[%c4, %c0_15], %19 {strides = array<i32>} : memref<36x256xf32, #tpu.memory_space<vmem>>, vector<2x256xf32>,
    %21 = vector.broadcast %15 : vector<1x256xf32> to vector<2x256xf32>
    %22 = arith.mulf %17, %21 : vector<2x256xf32>
    %c6 = arith.constant 6 : index
    %c0_16 = arith.constant 0 : index
    %23 = vector.load %arg10[%c6, %c0_16] : memref<36x256xf32, #tpu.memory_space<vmem>>, vector<2x256xf32>
    tpu.vector_store %arg10[%c6, %c0_16], %22 {strides = array<i32>} : memref<36x256xf32, #tpu.memory_space<vmem>>, vector<2x256xf32>,
    %c2_17 = arith.constant 2 : index
    %c0_18 = arith.constant 0 : index
    %24 = vector.load %arg4[%c2_17, %c0_18] : memref<9x256xf32, #tpu.memory_space<vmem>>, vector<1x256xf32>
    %c15_i32 = arith.constant 15 : i32
    %25 = tpu.dynamic_rotate %5 by %c15_i32 dim 1 : vector<2x256xf32>, i32 -> vector<2x256xf32>
    %c15_i32_19 = arith.constant 15 : i32
    %26 = tpu.dynamic_rotate %3 by %c15_i32_19 dim 1 : vector<2x256xf32>, i32 -> vector<2x256xf32>
    %27 = vector.broadcast %24 : vector<1x256xf32> to vector<2x256xf32>
    %28 = arith.mulf %25, %27 : vector<2x256xf32>
    %c8 = arith.constant 8 : index
    %c0_20 = arith.constant 0 : index
    %29 = vector.load %arg10[%c8, %c0_20] : memref<36x256xf32, #tpu.memory_space<vmem>>, vector<2x256xf32>
    tpu.vector_store %arg10[%c8, %c0_20], %28 {strides = array<i32>} : memref<36x256xf32, #tpu.memory_space<vmem>>, vector<2x256xf32>,
    %30 = vector.broadcast %24 : vector<1x256xf32> to vector<2x256xf32>
    %31 = arith.mulf %26, %30 : vector<2x256xf32>
    %c10 = arith.constant 10 : index
    %c0_21 = arith.constant 0 : index
    %32 = vector.load %arg10[%c10, %c0_21] : memref<36x256xf32, #tpu.memory_space<vmem>>, vector<2x256xf32>
    tpu.vector_store %arg10[%c10, %c0_21], %31 {strides = array<i32>} : memref<36x256xf32, #tpu.memory_space<vmem>>, vector<2x256xf32>,
    %c3 = arith.constant 3 : index
    %c0_22 = arith.constant 0 : index
    %33 = vector.load %arg4[%c3, %c0_22] : memref<9x256xf32, #tpu.memory_space<vmem>>, vector<1x256xf32>
    %c1_i32 = arith.constant 1 : i32
    %34 = tpu.dynamic_rotate %5 by %c1_i32 dim 1 : vector<2x256xf32>, i32 -> vector<2x256xf32>
    %c1_i32_23 = arith.constant 1 : i32
    %35 = tpu.dynamic_rotate %3 by %c1_i32_23 dim 1 : vector<2x256xf32>, i32 -> vector<2x256xf32>
    %36 = vector.broadcast %33 : vector<1x256xf32> to vector<2x256xf32>
    %37 = arith.mulf %34, %36 : vector<2x256xf32>
    %c12 = arith.constant 12 : index
    %c0_24 = arith.constant 0 : index
    %38 = vector.load %arg10[%c12, %c0_24] : memref<36x256xf32, #tpu.memory_space<vmem>>, vector<2x256xf32>
    tpu.vector_store %arg10[%c12, %c0_24], %37 {strides = array<i32>} : memref<36x256xf32, #tpu.memory_space<vmem>>, vector<2x256xf32>,
    %39 = vector.broadcast %33 : vector<1x256xf32> to vector<2x256xf32>
    %40 = arith.mulf %35, %39 : vector<2x256xf32>
    %c14 = arith.constant 14 : index
    %c0_25 = arith.constant 0 : index
    %41 = vector.load %arg10[%c14, %c0_25] : memref<36x256xf32, #tpu.memory_space<vmem>>, vector<2x256xf32>
    tpu.vector_store %arg10[%c14, %c0_25], %40 {strides = array<i32>} : memref<36x256xf32, #tpu.memory_space<vmem>>, vector<2x256xf32>,
    %c4_26 = arith.constant 4 : index
    %c0_27 = arith.constant 0 : index
    %42 = vector.load %arg4[%c4_26, %c0_27] : memref<9x256xf32, #tpu.memory_space<vmem>>, vector<1x256xf32>
    %43 = vector.broadcast %42 : vector<1x256xf32> to vector<2x256xf32>
    %44 = arith.mulf %5, %43 : vector<2x256xf32>
    %c16 = arith.constant 16 : index
    %c0_28 = arith.constant 0 : index
    %45 = vector.load %arg10[%c16, %c0_28] : memref<36x256xf32, #tpu.memory_space<vmem>>, vector<2x256xf32>
    tpu.vector_store %arg10[%c16, %c0_28], %44 {strides = array<i32>} : memref<36x256xf32, #tpu.memory_space<vmem>>, vector<2x256xf32>,
    %46 = vector.broadcast %42 : vector<1x256xf32> to vector<2x256xf32>
    %47 = arith.mulf %3, %46 : vector<2x256xf32>
    %c18 = arith.constant 18 : index
    %c0_29 = arith.constant 0 : index
    %48 = vector.load %arg10[%c18, %c0_29] : memref<36x256xf32, #tpu.memory_space<vmem>>, vector<2x256xf32>
    tpu.vector_store %arg10[%c18, %c0_29], %47 {strides = array<i32>} : memref<36x256xf32, #tpu.memory_space<vmem>>, vector<2x256xf32>,
    %c5 = arith.constant 5 : index
    %c0_30 = arith.constant 0 : index
    %49 = vector.load %arg4[%c5, %c0_30] : memref<9x256xf32, #tpu.memory_space<vmem>>, vector<1x256xf32>
    %c255_i32 = arith.constant 255 : i32
    %50 = tpu.dynamic_rotate %5 by %c255_i32 dim 1 : vector<2x256xf32>, i32 -> vector<2x256xf32>
    %c255_i32_31 = arith.constant 255 : i32
    %51 = tpu.dynamic_rotate %3 by %c255_i32_31 dim 1 : vector<2x256xf32>, i32 -> vector<2x256xf32>
    %52 = vector.broadcast %49 : vector<1x256xf32> to vector<2x256xf32>
    %53 = arith.mulf %50, %52 : vector<2x256xf32>
    %c20 = arith.constant 20 : index
    %c0_32 = arith.constant 0 : index
    %54 = vector.load %arg10[%c20, %c0_32] : memref<36x256xf32, #tpu.memory_space<vmem>>, vector<2x256xf32>
    tpu.vector_store %arg10[%c20, %c0_32], %53 {strides = array<i32>} : memref<36x256xf32, #tpu.memory_space<vmem>>, vector<2x256xf32>,
    %55 = vector.broadcast %49 : vector<1x256xf32> to vector<2x256xf32>
    %56 = arith.mulf %51, %55 : vector<2x256xf32>
    %c22 = arith.constant 22 : index
    %c0_33 = arith.constant 0 : index
    %57 = vector.load %arg10[%c22, %c0_33] : memref<36x256xf32, #tpu.memory_space<vmem>>, vector<2x256xf32>
    tpu.vector_store %arg10[%c22, %c0_33], %56 {strides = array<i32>} : memref<36x256xf32, #tpu.memory_space<vmem>>, vector<2x256xf32>,
    %c6_34 = arith.constant 6 : index
    %c0_35 = arith.constant 0 : index
    %58 = vector.load %arg4[%c6_34, %c0_35] : memref<9x256xf32, #tpu.memory_space<vmem>>, vector<1x256xf32>
    %c241_i32 = arith.constant 241 : i32
    %59 = tpu.dynamic_rotate %5 by %c241_i32 dim 1 : vector<2x256xf32>, i32 -> vector<2x256xf32>
    %c241_i32_36 = arith.constant 241 : i32
    %60 = tpu.dynamic_rotate %3 by %c241_i32_36 dim 1 : vector<2x256xf32>, i32 -> vector<2x256xf32>
    %61 = vector.broadcast %58 : vector<1x256xf32> to vector<2x256xf32>
    %62 = arith.mulf %59, %61 : vector<2x256xf32>
    %c24 = arith.constant 24 : index
    %c0_37 = arith.constant 0 : index
    %63 = vector.load %arg10[%c24, %c0_37] : memref<36x256xf32, #tpu.memory_space<vmem>>, vector<2x256xf32>
    tpu.vector_store %arg10[%c24, %c0_37], %62 {strides = array<i32>} : memref<36x256xf32, #tpu.memory_space<vmem>>, vector<2x256xf32>,
    %64 = vector.broadcast %58 : vector<1x256xf32> to vector<2x256xf32>
    %65 = arith.mulf %60, %64 : vector<2x256xf32>
    %c26 = arith.constant 26 : index
    %c0_38 = arith.constant 0 : index
    %66 = vector.load %arg10[%c26, %c0_38] : memref<36x256xf32, #tpu.memory_space<vmem>>, vector<2x256xf32>
    tpu.vector_store %arg10[%c26, %c0_38], %65 {strides = array<i32>} : memref<36x256xf32, #tpu.memory_space<vmem>>, vector<2x256xf32>,
    %c7 = arith.constant 7 : index
    %c0_39 = arith.constant 0 : index
    %67 = vector.load %arg4[%c7, %c0_39] : memref<9x256xf32, #tpu.memory_space<vmem>>, vector<1x256xf32>
    %c240_i32 = arith.constant 240 : i32
    %68 = tpu.dynamic_rotate %5 by %c240_i32 dim 1 : vector<2x256xf32>, i32 -> vector<2x256xf32>
    %c240_i32_40 = arith.constant 240 : i32
    %69 = tpu.dynamic_rotate %3 by %c240_i32_40 dim 1 : vector<2x256xf32>, i32 -> vector<2x256xf32>
    %70 = vector.broadcast %67 : vector<1x256xf32> to vector<2x256xf32>
    %71 = arith.mulf %68, %70 : vector<2x256xf32>
    %c28 = arith.constant 28 : index
    %c0_41 = arith.constant 0 : index
    %72 = vector.load %arg10[%c28, %c0_41] : memref<36x256xf32, #tpu.memory_space<vmem>>, vector<2x256xf32>
    tpu.vector_store %arg10[%c28, %c0_41], %71 {strides = array<i32>} : memref<36x256xf32, #tpu.memory_space<vmem>>, vector<2x256xf32>,
    %73 = vector.broadcast %67 : vector<1x256xf32> to vector<2x256xf32>
    %74 = arith.mulf %69, %73 : vector<2x256xf32>
    %c30 = arith.constant 30 : index
    %c0_42 = arith.constant 0 : index
    %75 = vector.load %arg10[%c30, %c0_42] : memref<36x256xf32, #tpu.memory_space<vmem>>, vector<2x256xf32>
    tpu.vector_store %arg10[%c30, %c0_42], %74 {strides = array<i32>} : memref<36x256xf32, #tpu.memory_space<vmem>>, vector<2x256xf32>,
    %c8_43 = arith.constant 8 : index
    %c0_44 = arith.constant 0 : index
    %76 = vector.load %arg4[%c8_43, %c0_44] : memref<9x256xf32, #tpu.memory_space<vmem>>, vector<1x256xf32>
    %c239_i32 = arith.constant 239 : i32
    %77 = tpu.dynamic_rotate %5 by %c239_i32 dim 1 : vector<2x256xf32>, i32 -> vector<2x256xf32>
    %c239_i32_45 = arith.constant 239 : i32
    %78 = tpu.dynamic_rotate %3 by %c239_i32_45 dim 1 : vector<2x256xf32>, i32 -> vector<2x256xf32>
    %79 = vector.broadcast %76 : vector<1x256xf32> to vector<2x256xf32>
    %80 = arith.mulf %77, %79 : vector<2x256xf32>
    %c32 = arith.constant 32 : index
    %c0_46 = arith.constant 0 : index
    %81 = vector.load %arg10[%c32, %c0_46] : memref<36x256xf32, #tpu.memory_space<vmem>>, vector<2x256xf32>
    tpu.vector_store %arg10[%c32, %c0_46], %80 {strides = array<i32>} : memref<36x256xf32, #tpu.memory_space<vmem>>, vector<2x256xf32>,
    %82 = vector.broadcast %76 : vector<1x256xf32> to vector<2x256xf32>
    %83 = arith.mulf %78, %82 : vector<2x256xf32>
    %c34 = arith.constant 34 : index
    %c0_47 = arith.constant 0 : index
    %84 = vector.load %arg10[%c34, %c0_47] : memref<36x256xf32, #tpu.memory_space<vmem>>, vector<2x256xf32>
    tpu.vector_store %arg10[%c34, %c0_47], %83 {strides = array<i32>} : memref<36x256xf32, #tpu.memory_space<vmem>>, vector<2x256xf32>,
    %c0_48 = arith.constant 0 : index
    %c0_49 = arith.constant 0 : index
    %85 = vector.load %arg5[%c0_48, %c0_49] : memref<4x36xf32, #tpu.memory_space<vmem>>, vector<4x36xf32>
    %c0_50 = arith.constant 0 : index
    %c0_51 = arith.constant 0 : index
    %86 = vector.load %arg10[%c0_50, %c0_51] : memref<36x256xf32, #tpu.memory_space<vmem>>, vector<36x256xf32>
    %cst_52 = arith.constant dense<0.000000e+00> : vector<4x256xf32>
    %87 = tpu.matmul %85, %86, %cst_52 {dimension_numbers = #tpu.dot_dimension_numbers<[1], [0], [0], [1], [0, 0, 1, 1], [], []>} : vector<4x36xf32>, vector<36x256xf32>, vector<4x256xf32> -> vector<4x256xf32>
    %c0_53 = arith.constant 0 : index
    %c0_54 = arith.constant 0 : index
    %88 = vector.load %arg6[%c0_53, %c0_54] : memref<4x1xf32, #tpu.memory_space<vmem>>, vector<4x1xf32>
    %89 = vector.broadcast %88 : vector<4x1xf32> to vector<4x256xf32>
    %90 = arith.addf %87, %89 : vector<4x256xf32>
    %cst_55 = arith.constant 0.000000e+00 : f32
    %91 = vector.broadcast %cst_55 : f32 to vector<4x256xf32>
    %92 = arith.maximumf %90, %91 : vector<4x256xf32>
    %c0_56 = arith.constant 0 : index
    %c0_57 = arith.constant 0 : index
    %93 = vector.load %arg4[%c0_56, %c0_57] : memref<9x256xf32, #tpu.memory_space<vmem>>, vector<1x256xf32>
    %c17_i32_58 = arith.constant 17 : i32
    %94 = tpu.dynamic_rotate %92 by %c17_i32_58 dim 1 : vector<4x256xf32>, i32 -> vector<4x256xf32>
    %95 = vector.broadcast %93 : vector<1x256xf32> to vector<4x256xf32>
    %96 = arith.mulf %94, %95 : vector<4x256xf32>
    %c0_59 = arith.constant 0 : index
    %c0_60 = arith.constant 0 : index
    %97 = vector.load %arg11[%c0_59, %c0_60] : memref<36x256xf32, #tpu.memory_space<vmem>>, vector<4x256xf32>
    tpu.vector_store %arg11[%c0_59, %c0_60], %96 {strides = array<i32>} : memref<36x256xf32, #tpu.memory_space<vmem>>, vector<4x256xf32>,
    %c1_61 = arith.constant 1 : index
    %c0_62 = arith.constant 0 : index
    %98 = vector.load %arg4[%c1_61, %c0_62] : memref<9x256xf32, #tpu.memory_space<vmem>>, vector<1x256xf32>
    %c16_i32_63 = arith.constant 16 : i32
    %99 = tpu.dynamic_rotate %92 by %c16_i32_63 dim 1 : vector<4x256xf32>, i32 -> vector<4x256xf32>
    %100 = vector.broadcast %98 : vector<1x256xf32> to vector<4x256xf32>
    %101 = arith.mulf %99, %100 : vector<4x256xf32>
    %c4_64 = arith.constant 4 : index
    %c0_65 = arith.constant 0 : index
    %102 = vector.load %arg11[%c4_64, %c0_65] : memref<36x256xf32, #tpu.memory_space<vmem>>, vector<4x256xf32>
    tpu.vector_store %arg11[%c4_64, %c0_65], %101 {strides = array<i32>} : memref<36x256xf32, #tpu.memory_space<vmem>>, vector<4x256xf32>,
    %c2_66 = arith.constant 2 : index
    %c0_67 = arith.constant 0 : index
    %103 = vector.load %arg4[%c2_66, %c0_67] : memref<9x256xf32, #tpu.memory_space<vmem>>, vector<1x256xf32>
    %c15_i32_68 = arith.constant 15 : i32
    %104 = tpu.dynamic_rotate %92 by %c15_i32_68 dim 1 : vector<4x256xf32>, i32 -> vector<4x256xf32>
    %105 = vector.broadcast %103 : vector<1x256xf32> to vector<4x256xf32>
    %106 = arith.mulf %104, %105 : vector<4x256xf32>
    %c8_69 = arith.constant 8 : index
    %c0_70 = arith.constant 0 : index
    %107 = vector.load %arg11[%c8_69, %c0_70] : memref<36x256xf32, #tpu.memory_space<vmem>>, vector<4x256xf32>
    tpu.vector_store %arg11[%c8_69, %c0_70], %106 {strides = array<i32>} : memref<36x256xf32, #tpu.memory_space<vmem>>, vector<4x256xf32>,
    %c3_71 = arith.constant 3 : index
    %c0_72 = arith.constant 0 : index
    %108 = vector.load %arg4[%c3_71, %c0_72] : memref<9x256xf32, #tpu.memory_space<vmem>>, vector<1x256xf32>
    %c1_i32_73 = arith.constant 1 : i32
    %109 = tpu.dynamic_rotate %92 by %c1_i32_73 dim 1 : vector<4x256xf32>, i32 -> vector<4x256xf32>
    %110 = vector.broadcast %108 : vector<1x256xf32> to vector<4x256xf32>
    %111 = arith.mulf %109, %110 : vector<4x256xf32>
    %c12_74 = arith.constant 12 : index
    %c0_75 = arith.constant 0 : index
    %112 = vector.load %arg11[%c12_74, %c0_75] : memref<36x256xf32, #tpu.memory_space<vmem>>, vector<4x256xf32>
    tpu.vector_store %arg11[%c12_74, %c0_75], %111 {strides = array<i32>} : memref<36x256xf32, #tpu.memory_space<vmem>>, vector<4x256xf32>,
    %c4_76 = arith.constant 4 : index
    %c0_77 = arith.constant 0 : index
    %113 = vector.load %arg4[%c4_76, %c0_77] : memref<9x256xf32, #tpu.memory_space<vmem>>, vector<1x256xf32>
    %114 = vector.broadcast %113 : vector<1x256xf32> to vector<4x256xf32>
    %115 = arith.mulf %92, %114 : vector<4x256xf32>
    %c16_78 = arith.constant 16 : index
    %c0_79 = arith.constant 0 : index
    %116 = vector.load %arg11[%c16_78, %c0_79] : memref<36x256xf32, #tpu.memory_space<vmem>>, vector<4x256xf32>
    tpu.vector_store %arg11[%c16_78, %c0_79], %115 {strides = array<i32>} : memref<36x256xf32, #tpu.memory_space<vmem>>, vector<4x256xf32>,
    %c5_80 = arith.constant 5 : index
    %c0_81 = arith.constant 0 : index
    %117 = vector.load %arg4[%c5_80, %c0_81] : memref<9x256xf32, #tpu.memory_space<vmem>>, vector<1x256xf32>
    %c255_i32_82 = arith.constant 255 : i32
    %118 = tpu.dynamic_rotate %92 by %c255_i32_82 dim 1 : vector<4x256xf32>, i32 -> vector<4x256xf32>
    %119 = vector.broadcast %117 : vector<1x256xf32> to vector<4x256xf32>
    %120 = arith.mulf %118, %119 : vector<4x256xf32>
    %c20_83 = arith.constant 20 : index
    %c0_84 = arith.constant 0 : index
    %121 = vector.load %arg11[%c20_83, %c0_84] : memref<36x256xf32, #tpu.memory_space<vmem>>, vector<4x256xf32>
    tpu.vector_store %arg11[%c20_83, %c0_84], %120 {strides = array<i32>} : memref<36x256xf32, #tpu.memory_space<vmem>>, vector<4x256xf32>,
    %c6_85 = arith.constant 6 : index
    %c0_86 = arith.constant 0 : index
    %122 = vector.load %arg4[%c6_85, %c0_86] : memref<9x256xf32, #tpu.memory_space<vmem>>, vector<1x256xf32>
    %c241_i32_87 = arith.constant 241 : i32
    %123 = tpu.dynamic_rotate %92 by %c241_i32_87 dim 1 : vector<4x256xf32>, i32 -> vector<4x256xf32>
    %124 = vector.broadcast %122 : vector<1x256xf32> to vector<4x256xf32>
    %125 = arith.mulf %123, %124 : vector<4x256xf32>
    %c24_88 = arith.constant 24 : index
    %c0_89 = arith.constant 0 : index
    %126 = vector.load %arg11[%c24_88, %c0_89] : memref<36x256xf32, #tpu.memory_space<vmem>>, vector<4x256xf32>
    tpu.vector_store %arg11[%c24_88, %c0_89], %125 {strides = array<i32>} : memref<36x256xf32, #tpu.memory_space<vmem>>, vector<4x256xf32>,
    %c7_90 = arith.constant 7 : index
    %c0_91 = arith.constant 0 : index
    %127 = vector.load %arg4[%c7_90, %c0_91] : memref<9x256xf32, #tpu.memory_space<vmem>>, vector<1x256xf32>
    %c240_i32_92 = arith.constant 240 : i32
    %128 = tpu.dynamic_rotate %92 by %c240_i32_92 dim 1 : vector<4x256xf32>, i32 -> vector<4x256xf32>
    %129 = vector.broadcast %127 : vector<1x256xf32> to vector<4x256xf32>
    %130 = arith.mulf %128, %129 : vector<4x256xf32>
    %c28_93 = arith.constant 28 : index
    %c0_94 = arith.constant 0 : index
    %131 = vector.load %arg11[%c28_93, %c0_94] : memref<36x256xf32, #tpu.memory_space<vmem>>, vector<4x256xf32>
    tpu.vector_store %arg11[%c28_93, %c0_94], %130 {strides = array<i32>} : memref<36x256xf32, #tpu.memory_space<vmem>>, vector<4x256xf32>,
    %c8_95 = arith.constant 8 : index
    %c0_96 = arith.constant 0 : index
    %132 = vector.load %arg4[%c8_95, %c0_96] : memref<9x256xf32, #tpu.memory_space<vmem>>, vector<1x256xf32>
    %c239_i32_97 = arith.constant 239 : i32
    %133 = tpu.dynamic_rotate %92 by %c239_i32_97 dim 1 : vector<4x256xf32>, i32 -> vector<4x256xf32>
    %134 = vector.broadcast %132 : vector<1x256xf32> to vector<4x256xf32>
    %135 = arith.mulf %133, %134 : vector<4x256xf32>
    %c32_98 = arith.constant 32 : index
    %c0_99 = arith.constant 0 : index
    %136 = vector.load %arg11[%c32_98, %c0_99] : memref<36x256xf32, #tpu.memory_space<vmem>>, vector<4x256xf32>
    tpu.vector_store %arg11[%c32_98, %c0_99], %135 {strides = array<i32>} : memref<36x256xf32, #tpu.memory_space<vmem>>, vector<4x256xf32>,
    %c0_100 = arith.constant 0 : index
    %c0_101 = arith.constant 0 : index
    %137 = vector.load %arg7[%c0_100, %c0_101] : memref<8x36xf32, #tpu.memory_space<vmem>>, vector<8x36xf32>
    %c0_102 = arith.constant 0 : index
    %c0_103 = arith.constant 0 : index
    %138 = vector.load %arg11[%c0_102, %c0_103] : memref<36x256xf32, #tpu.memory_space<vmem>>, vector<36x256xf32>
    %cst_104 = arith.constant dense<0.000000e+00> : vector<8x256xf32>
    %139 = tpu.matmul %137, %138, %cst_104 {dimension_numbers = #tpu.dot_dimension_numbers<[1], [0], [0], [1], [0, 0, 1, 1], [], []>} : vector<8x36xf32>, vector<36x256xf32>, vector<8x256xf32> -> vector<8x256xf32>
    %c0_105 = arith.constant 0 : index
    %c0_106 = arith.constant 0 : index
    %140 = vector.load %arg8[%c0_105, %c0_106] : memref<8x1xf32, #tpu.memory_space<vmem>>, vector<8x1xf32>
    %141 = vector.broadcast %140 : vector<8x1xf32> to vector<8x256xf32>
    %142 = arith.addf %139, %141 : vector<8x256xf32>
    %cst_107 = arith.constant 0.000000e+00 : f32
    %143 = vector.broadcast %cst_107 : f32 to vector<8x256xf32>
    %144 = arith.maximumf %142, %143 : vector<8x256xf32>
    %c0_108 = arith.constant 0 : index
    %c0_109 = arith.constant 0 : index
    %c0_110 = arith.constant 0 : index
    %145 = vector.load %arg9[%c0_108, %c0_109, %c0_110] : memref<1x8x256xf32, #tpu.memory_space<vmem>>, vector<1x8x256xf32>
    %146 = vector.shape_cast %145 : vector<1x8x256xf32> to vector<8x256xf32>
    %147 = vector.shape_cast %144 : vector<8x256xf32> to vector<1x8x256xf32>
    tpu.vector_store %arg9[%c0_108, %c0_109, %c0_110], %147 {strides = array<i32>} : memref<1x8x256xf32, #tpu.memory_space<vmem>>, vector<1x8x256xf32>,
    return
  }
  func.func @transform_0(%arg0: i32) -> (i32, i32, i32) {
    %c0_i32 = arith.constant 0 : i32
    %c0_i32_0 = arith.constant 0 : i32
    %c0_i32_1 = arith.constant 0 : i32
    return %arg0, %c0_i32, %c0_i32_0 : i32, i32, i32
  }
  func.func @transform_1(%arg0: i32) -> (i32, i32, i32) {
    %c0_i32 = arith.constant 0 : i32
    %c0_i32_0 = arith.constant 0 : i32
    %c0_i32_1 = arith.constant 0 : i32
    return %arg0, %c0_i32, %c0_i32_0 : i32, i32, i32
  }
  func.func @transform_2(%arg0: i32) -> (i32, i32) {
    %c0_i32 = arith.constant 0 : i32
    %c0_i32_0 = arith.constant 0 : i32
    %c0_i32_1 = arith.constant 0 : i32
    return %c0_i32, %c0_i32_0 : i32, i32
  }
  func.func @transform_3(%arg0: i32) -> (i32, i32) {
    %c0_i32 = arith.constant 0 : i32
    %c0_i32_0 = arith.constant 0 : i32
    %c0_i32_1 = arith.constant 0 : i32
    return %c0_i32, %c0_i32_0 : i32, i32
  }
  func.func @transform_4(%arg0: i32) -> (i32, i32) {
    %c0_i32 = arith.constant 0 : i32
    %c0_i32_0 = arith.constant 0 : i32
    %c0_i32_1 = arith.constant 0 : i32
    return %c0_i32, %c0_i32_0 : i32, i32
  }
  func.func @transform_5(%arg0: i32) -> (i32, i32) {
    %c0_i32 = arith.constant 0 : i32
    %c0_i32_0 = arith.constant 0 : i32
    %c0_i32_1 = arith.constant 0 : i32
    return %c0_i32, %c0_i32_0 : i32, i32
  }
  func.func @transform_6(%arg0: i32) -> (i32, i32) {
    %c0_i32 = arith.constant 0 : i32
    %c0_i32_0 = arith.constant 0 : i32
    %c0_i32_1 = arith.constant 0 : i32
    return %c0_i32, %c0_i32_0 : i32, i32
  }
  func.func @transform_7(%arg0: i32) -> (i32, i32) {
    %c0_i32 = arith.constant 0 : i32
    %c0_i32_0 = arith.constant 0 : i32
    %c0_i32_1 = arith.constant 0 : i32
    return %c0_i32, %c0_i32_0 : i32, i32
  }
  func.func @transform_8(%arg0: i32) -> (i32, i32, i32) {
    %c0_i32 = arith.constant 0 : i32
    %c0_i32_0 = arith.constant 0 : i32
    %c0_i32_1 = arith.constant 0 : i32
    return %arg0, %c0_i32, %c0_i32_0 : i32, i32, i32
  }
}

</mosaic_0001>

<llo_original>
// kernel: tpu_custom_call.1
$region0: #{tpu_custom_call.1}
  #allocation0 [shape = 'u32[]', space=smem, size = 0x4, offset = 0x4, fixed_abs, tag = 'smem constant byte address 0x4 - core index']
  #allocation1 [shape = 'u32[144,128]{1,0:T(1,128)}', space=vmem, size = 0x12000, scoped, tag = 'internal scratch']
  #allocation2 [shape = 'f32[36,256]{1,0:T(8,128)}', space=vmem, size = 0xa000, scoped, tag = 'scratch operand']
  #allocation3 [shape = 'f32[36,256]{1,0:T(8,128)}', space=vmem, size = 0xa000, scoped, tag = 'scratch operand']
  %s0 = inlined_call_operand.hbm [shape: f32[2,2,64], index: 0, kind: input, shape index: {}]
  %s1 = inlined_call_operand.vmem [shape: f32[2,2,256], index: 1, kind: input, shape index: {}]
  %s2 = inlined_call_operand.hbm [shape: f32[64,256], index: 2, kind: input, shape index: {}]
  %s3 = inlined_call_operand.hbm [shape: f32[9,256], index: 3, kind: input, shape index: {}]
  %s4 = inlined_call_operand.vmem [shape: f32[4,36], index: 4, kind: input, shape index: {}]
  %s5 = inlined_call_operand.vmem [shape: f32[4,1], index: 5, kind: input, shape index: {}]
  %s6 = inlined_call_operand.vmem [shape: f32[8,36], index: 6, kind: input, shape index: {}]
  %s7 = inlined_call_operand.vmem [shape: f32[8,1], index: 7, kind: input, shape index: {}]
  %s8 = inlined_call_operand.hbm [shape: f32[2,8,256], index: 8, kind: output, shape index: {}]
  %s9 = sld [smem:[#allocation0]]
  $region77: #{tpu_custom_call.1} parent=0
    _
  %s11 = ssub.s32 1, %s9
  %s12 = scalar_select 0, %s11, %s9
  $region1: #{tpu_custom_call.1} parent=0
    #allocation4 [shape = 'u8[2048]{0}', space=vmem, size = 0x800, scoped, tag = 'input window, operand 0']
    #allocation5 [shape = 's32[2]{0}', space=sflag, size = 0x8, scoped, tag = 'scoped memory for tpu_custom_call.1']
    #allocation6 [shape = 's32[2]{0}', space=sflag, size = 0x8, scoped, tag = 'scoped memory for tpu_custom_call.1']
    #allocation7 [shape = 'u8[65536]{0}', space=vmem, size = 0x10000, scoped, tag = 'input window, operand 2, single buffered']
    #allocation8 [shape = 's32[1]{0}', space=sflag, size = 0x4, scoped, tag = 'scoped memory for tpu_custom_call.1']
    #allocation9 [shape = 'u8[16384]{0}', space=vmem, size = 0x4000, scoped, tag = 'input window, operand 3, single buffered']
    #allocation10 [shape = 'u8[16384]{0}', space=vmem, size = 0x4000, scoped, tag = 'output window, operand 0']
    %13 = vsyncpa [#allocation5], 0
    %s14 = scalar_lea.sflag [#allocation5], 1
    %15 = vsyncpa %s14, 0
    %16 = vsyncpa [#allocation8], 0
    %17 = vsyncpa [#allocation6], 0
    %s18 = scalar_lea.sflag [#allocation6], 1
    %19 = vsyncpa %s18, 0
    loop: start=0, step=1, limit=4
    $region2: #{tpu_custom_call.1} parent=1 // loop_pre_header
      _
    $region3: #{tpu_custom_call.1} parent=1 // loop_header
      %s21 = sphi 0, %s25
      %p22 = scmp.ge.s32.totalorder %s21, 4
      %s31 = sphi 0, %s33
      %s34 = sphi 0, %s31
      %s35 = sphi 0, %s34
      %s51 = sphi 0, %s35
      %s57 = sphi 0, %s59
      %s60 = sphi 0, %s57
      %s61 = sphi 0, %s60
      %s77 = sphi 0, %s61
      %s81 = sphi 0, %s81
      %s83 = sphi 0, %s81
      %s84 = sphi 0, %s83
      %s98 = sphi 0, %s84
      %s102 = sphi 0, %s102
      %s104 = sphi 0, %s102
      %s105 = sphi 0, %s104
      %s119 = sphi 0, %s105
      %s123 = sphi 0, %s123
      %s125 = sphi 0, %s123
      %s126 = sphi 0, %s125
      %s140 = sphi 0, %s126
      %s144 = sphi 0, %s144
      %s146 = sphi 0, %s144
      %s147 = sphi 0, %s146
      %s161 = sphi 0, %s147
      %s165 = sphi 0, %s165
      %s167 = sphi 0, %s165
      %s168 = sphi 0, %s167
      %s182 = sphi 0, %s168
      %s186 = sphi 0, %s186
      %s188 = sphi 0, %s186
      %s189 = sphi 0, %s188
      %s203 = sphi 0, %s189
      %s209 = sphi 0, %s211
      %s212 = sphi 0, %s209
      %s213 = sphi 0, %s212
      %s229 = sphi 0, %s213
    $region4: #{tpu_custom_call.1} parent=1 // loop_header_branch
      %24 = sbr.rel (%p22) target = $region8
    $region5: #{tpu_custom_call.1} parent=1 // loop_body
      %s26 = ssub.s32 %s21, 1
      %s27 = ssub.s32 %s21, 2
      %s28 = sadd.s32 %s21, 1
      %s29 = ssub.s32 %s21, %s28
      %p30 = scmp.eq.s32.totalorder %s29, 0
      %s32 = sadd.s32 %s31, 1
      %s33 = scalar_select %p30, %s31, %s32
      %p36 = pneg %p30
      %p37 = scmp.eq.s32.totalorder %s21, 1
      %p38 = por %p36, %p37
      %p39 = scmp.ne.s32.totalorder %s31, %s34
      %p40 = scmp.eq.s32.totalorder %s21, 0
      %p41 = por %p39, %p40
      %p42 = scmp.ne.s32.totalorder %s31, %s34
      %p43 = scmp.eq.s32.totalorder %s26, 1
      %p44 = por %p42, %p43
      %p45 = scmp.ne.s32.totalorder %s34, %s35
      %p46 = scmp.eq.s32.totalorder %s26, 0
      %p47 = por %p45, %p46
      %p48 = scmp.ne.s32.totalorder %s34, %s35
      %p49 = scmp.eq.s32.totalorder %s27, 1
      %p50 = por %p48, %p49
      %p52 = scmp.ne.s32.totalorder %s35, %s51
      %p53 = scmp.eq.s32.totalorder %s27, 0
      %p54 = por %p52, %p53
      %s55 = ssub.s32 %s21, %s28
      %p56 = scmp.eq.s32.totalorder %s55, 0
      %s58 = sadd.s32 %s57, 1
      %s59 = scalar_select %p56, %s57, %s58
      %p62 = pneg %p56
      %p63 = scmp.eq.s32.totalorder %s21, 1
      %p64 = por %p62, %p63
      %p65 = scmp.ne.s32.totalorder %s57, %s60
      %p66 = scmp.eq.s32.totalorder %s21, 0
      %p67 = por %p65, %p66
      %p68 = scmp.ne.s32.totalorder %s57, %s60
      %p69 = scmp.eq.s32.totalorder %s26, 1
      %p70 = por %p68, %p69
      %p71 = scmp.ne.s32.totalorder %s60, %s61
      %p72 = scmp.eq.s32.totalorder %s26, 0
      %p73 = por %p71, %p72
      %p74 = scmp.ne.s32.totalorder %s60, %s61
      %p75 = scmp.eq.s32.totalorder %s27, 1
      %p76 = por %p74, %p75
      %p78 = scmp.ne.s32.totalorder %s61, %s77
      %p79 = scmp.eq.s32.totalorder %s27, 0
      %p80 = por %p78, %p79
      %s82 = sadd.s32 %s81, 1
      %p85 = scmp.eq.s32.totalorder %s21, 1
      %p86 = scmp.ne.s32.totalorder %s81, %s83
      %p87 = scmp.eq.s32.totalorder %s21, 0
      %p88 = por %p86, %p87
      %p89 = scmp.ne.s32.totalorder %s81, %s83
      %p90 = scmp.eq.s32.totalorder %s26, 1
      %p91 = por %p89, %p90
      %p92 = scmp.ne.s32.totalorder %s83, %s84
      %p93 = scmp.eq.s32.totalorder %s26, 0
      %p94 = por %p92, %p93
      %p95 = scmp.ne.s32.totalorder %s83, %s84
      %p96 = scmp.eq.s32.totalorder %s27, 1
      %p97 = por %p95, %p96
      %p99 = scmp.ne.s32.totalorder %s84, %s98
      %p100 = scmp.eq.s32.totalorder %s27, 0
      %p101 = por %p99, %p100
      %s103 = sadd.s32 %s102, 1
      %p106 = scmp.eq.s32.totalorder %s21, 1
      %p107 = scmp.ne.s32.totalorder %s102, %s104
      %p108 = scmp.eq.s32.totalorder %s21, 0
      %p109 = por %p107, %p108
      %p110 = scmp.ne.s32.totalorder %s102, %s104
      %p111 = scmp.eq.s32.totalorder %s26, 1
      %p112 = por %p110, %p111
      %p113 = scmp.ne.s32.totalorder %s104, %s105
      %p114 = scmp.eq.s32.totalorder %s26, 0
      %p115 = por %p113, %p114
      %p116 = scmp.ne.s32.totalorder %s104, %s105
      %p117 = scmp.eq.s32.totalorder %s27, 1
      %p118 = por %p116, %p117
      %p120 = scmp.ne.s32.totalorder %s105, %s119
      %p121 = scmp.eq.s32.totalorder %s27, 0
      %p122 = por %p120, %p121
      %s124 = sadd.s32 %s123, 1
      %p127 = scmp.eq.s32.totalorder %s21, 1
      %p128 = scmp.ne.s32.totalorder %s123, %s125
      %p129 = scmp.eq.s32.totalorder %s21, 0
      %p130 = por %p128, %p129
      %p131 = scmp.ne.s32.totalorder %s123, %s125
      %p132 = scmp.eq.s32.totalorder %s26, 1
      %p133 = por %p131, %p132
      %p134 = scmp.ne.s32.totalorder %s125, %s126
      %p135 = scmp.eq.s32.totalorder %s26, 0
      %p136 = por %p134, %p135
      %p137 = scmp.ne.s32.totalorder %s125, %s126
      %p138 = scmp.eq.s32.totalorder %s27, 1
      %p139 = por %p137, %p138
      %p141 = scmp.ne.s32.totalorder %s126, %s140
      %p142 = scmp.eq.s32.totalorder %s27, 0
      %p143 = por %p141, %p142
      %s145 = sadd.s32 %s144, 1
      %p148 = scmp.eq.s32.totalorder %s21, 1
      %p149 = scmp.ne.s32.totalorder %s144, %s146
      %p150 = scmp.eq.s32.totalorder %s21, 0
      %p151 = por %p149, %p150
      %p152 = scmp.ne.s32.totalorder %s144, %s146
      %p153 = scmp.eq.s32.totalorder %s26, 1
      %p154 = por %p152, %p153
      %p155 = scmp.ne.s32.totalorder %s146, %s147
      %p156 = scmp.eq.s32.totalorder %s26, 0
      %p157 = por %p155, %p156
      %p158 = scmp.ne.s32.totalorder %s146, %s147
      %p159 = scmp.eq.s32.totalorder %s27, 1
      %p160 = por %p158, %p159
      %p162 = scmp.ne.s32.totalorder %s147, %s161
      %p163 = scmp.eq.s32.totalorder %s27, 0
      %p164 = por %p162, %p163
      %s166 = sadd.s32 %s165, 1
      %p169 = scmp.eq.s32.totalorder %s21, 1
      %p170 = scmp.ne.s32.totalorder %s165, %s167
      %p171 = scmp.eq.s32.totalorder %s21, 0
      %p172 = por %p170, %p171
      %p173 = scmp.ne.s32.totalorder %s165, %s167
      %p174 = scmp.eq.s32.totalorder %s26, 1
      %p175 = por %p173, %p174
      %p176 = scmp.ne.s32.totalorder %s167, %s168
      %p177 = scmp.eq.s32.totalorder %s26, 0
      %p178 = por %p176, %p177
      %p179 = scmp.ne.s32.totalorder %s167, %s168
      %p180 = scmp.eq.s32.totalorder %s27, 1
      %p181 = por %p179, %p180
      %p183 = scmp.ne.s32.totalorder %s168, %s182
      %p184 = scmp.eq.s32.totalorder %s27, 0
      %p185 = por %p183, %p184
      %s187 = sadd.s32 %s186, 1
      %p190 = scmp.eq.s32.totalorder %s21, 1
      %p191 = scmp.ne.s32.totalorder %s186, %s188
      %p192 = scmp.eq.s32.totalorder %s21, 0
      %p193 = por %p191, %p192
      %p194 = scmp.ne.s32.totalorder %s186, %s188
      %p195 = scmp.eq.s32.totalorder %s26, 1
      %p196 = por %p194, %p195
      %p197 = scmp.ne.s32.totalorder %s188, %s189
      %p198 = scmp.eq.s32.totalorder %s26, 0
      %p199 = por %p197, %p198
      %p200 = scmp.ne.s32.totalorder %s188, %s189
      %p201 = scmp.eq.s32.totalorder %s27, 1
      %p202 = por %p200, %p201
      %p204 = scmp.ne.s32.totalorder %s189, %s203
      %p205 = scmp.eq.s32.totalorder %s27, 0
      %p206 = por %p204, %p205
      %s207 = ssub.s32 %s21, %s28
      %p208 = scmp.eq.s32.totalorder %s207, 0
      %s210 = sadd.s32 %s209, 1
      %s211 = scalar_select %p208, %s209, %s210
      %p214 = pneg %p208
      %p215 = scmp.eq.s32.totalorder %s21, 1
      %p216 = por %p214, %p215
      %p217 = scmp.ne.s32.totalorder %s209, %s212
      %p218 = scmp.eq.s32.totalorder %s21, 0
      %p219 = por %p217, %p218
      %p220 = scmp.ne.s32.totalorder %s209, %s212
      %p221 = scmp.eq.s32.totalorder %s26, 1
      %p222 = por %p220, %p221
      %p223 = scmp.ne.s32.totalorder %s212, %s213
      %p224 = scmp.eq.s32.totalorder %s26, 0
      %p225 = por %p223, %p224
      %p226 = scmp.ne.s32.totalorder %s212, %s213
      %p227 = scmp.eq.s32.totalorder %s27, 1
      %p228 = por %p226, %p227
      %p230 = scmp.ne.s32.totalorder %s213, %s229
      %p231 = scmp.eq.s32.totalorder %s27, 0
      %p232 = por %p230, %p231
      %p233 = scmp.le.s32.totalorder 1, %s21
      %p234 = scmp.lt.s32.totalorder %s21, 3
      %p235 = pnand %p233, %p234
      %p236 = pneg %p235
      // Predicated region
      $region9: #{tpu_custom_call.1} parent=5 // pred_check
        _
      $region10: #{tpu_custom_call.1} parent=5 // pred_check_branch
        %238 = sbr.rel (%p235) target = $region12
      $region11: #{tpu_custom_call.1} parent=5 // pred_region
        %s239 = ssub.s32 %s21, 1
        // Predicated region
        $region13: #{tpu_custom_call.1} parent=11 // pred_check
          %p240 = pneg %p94
        $region14: #{tpu_custom_call.1} parent=11 // pred_check_branch
          %242 = sbr.rel (%p240) target = $region16
        $region15: #{tpu_custom_call.1} parent=11 // pred_region
          %s244 = ssub.s32 2048, 2048
          %245 = vsyncadd [#allocation8], %s244
          %s246 = sshll.u32 [#allocation7], 4
          %s247 = int_to_ptr.vmem [resolvable:$true] %s246
          %252 = dma.hbm_to_vmem [thread:$0]  %s2, 2048, %s247, [#allocation8], 256, 256, 16
        $region16: #{tpu_custom_call.1} parent=11 // pred_fallthru
          _
        // Predicated region
        $region17: #{tpu_custom_call.1} parent=11 // pred_check
          %p253 = pneg %p115
        $region18: #{tpu_custom_call.1} parent=11 // pred_check_branch
          %255 = sbr.rel (%p253) target = $region20
        $region19: #{tpu_custom_call.1} parent=11 // pred_region
          %s257 = ssub.s32 512, 512
          %258 = vsyncadd [#allocation8], %s257
          %s259 = sshll.u32 [#allocation9], 4
          %s260 = int_to_ptr.vmem [resolvable:$true] %s259
          %265 = dma.hbm_to_vmem [thread:$0]  %s3, 512, %s260, [#allocation8], 256, 256, 16
        $region20: #{tpu_custom_call.1} parent=11 // pred_fallthru
          _
        // Predicated region
        $region21: #{tpu_custom_call.1} parent=11 // pred_check
          %p266 = pneg %p136
        $region22: #{tpu_custom_call.1} parent=11 // pred_check_branch
          %268 = sbr.rel (%p266) target = $region24
        $region23: #{tpu_custom_call.1} parent=11 // pred_region
          _
        $region24: #{tpu_custom_call.1} parent=11 // pred_fallthru
          _
        // Predicated region
        $region25: #{tpu_custom_call.1} parent=11 // pred_check
          %p269 = pneg %p157
        $region26: #{tpu_custom_call.1} parent=11 // pred_check_branch
          %271 = sbr.rel (%p269) target = $region28
        $region27: #{tpu_custom_call.1} parent=11 // pred_region
          _
        $region28: #{tpu_custom_call.1} parent=11 // pred_fallthru
          _
        // Predicated region
        $region29: #{tpu_custom_call.1} parent=11 // pred_check
          %p272 = pneg %p178
        $region30: #{tpu_custom_call.1} parent=11 // pred_check_branch
          %274 = sbr.rel (%p272) target = $region32
        $region31: #{tpu_custom_call.1} parent=11 // pred_region
          _
        $region32: #{tpu_custom_call.1} parent=11 // pred_fallthru
          _
        // Predicated region
        $region33: #{tpu_custom_call.1} parent=11 // pred_check
          %p275 = pneg %p199
        $region34: #{tpu_custom_call.1} parent=11 // pred_check_branch
          %277 = sbr.rel (%p275) target = $region36
        $region35: #{tpu_custom_call.1} parent=11 // pred_region
          _
        $region36: #{tpu_custom_call.1} parent=11 // pred_fallthru
          _
      $region12: #{tpu_custom_call.1} parent=5 // pred_fallthru
        _
      %p278 = scmp.lt.s32.totalorder %s21, 2
      // Predicated region
      $region37: #{tpu_custom_call.1} parent=5 // pred_check
        %p279 = pneg %p278
      $region38: #{tpu_custom_call.1} parent=5 // pred_check_branch
        %281 = sbr.rel (%p279) target = $region40
      $region39: #{tpu_custom_call.1} parent=5 // pred_region
        // Predicated region
        $region41: #{tpu_custom_call.1} parent=39 // pred_check
          %p282 = pneg %p41
        $region42: #{tpu_custom_call.1} parent=39 // pred_check_branch
          %284 = sbr.rel (%p282) target = $region44
        $region43: #{tpu_custom_call.1} parent=39 // pred_region
          %s285 = sand.u32 %s31, 1
          %s286 = scalar_lea.sflag [#allocation5], %s285
          %s287 = sand.u32 %s31, 1
          %s288 = smul.addr %s287, 2
          %s289 = scalar_lea.vmem [#allocation4], %s288
          %s291 = ssub.s32 32, 32
          %292 = vsyncadd %s286, %s291
          %s293 = smul.addr %s21, 32
          %s294 = scalar_lea.hbm %s0, %s293
          %s296 = sshll.u32 %s289, 4
          %s297 = int_to_ptr.vmem [resolvable:$true] %s296
          %299 = dma.hbm_to_vmem [thread:$0]  %s294, 32, %s297, %s286
        $region44: #{tpu_custom_call.1} parent=39 // pred_fallthru
          _
        // Predicated region
        $region45: #{tpu_custom_call.1} parent=39 // pred_check
          %p300 = pneg %p67
        $region46: #{tpu_custom_call.1} parent=39 // pred_check_branch
          %302 = sbr.rel (%p300) target = $region48
        $region47: #{tpu_custom_call.1} parent=39 // pred_region
          %p303 = scmp.lt.s32.totalorder %s21, 1
          %s304 = scalar_select %p303, %s21, 1
          %s305 = smul.addr %s304, 2
          %s306 = smul.addr %s305, 2
          %s307 = scalar_lea.vmem %s1, %s306
        $region48: #{tpu_custom_call.1} parent=39 // pred_fallthru
          _
      $region40: #{tpu_custom_call.1} parent=5 // pred_fallthru
        _
      %p308 = scmp.le.s32.totalorder 1, %s21
      %p309 = scmp.lt.s32.totalorder %s21, 3
      %p310 = pnand %p308, %p309
      %p311 = pneg %p310
      // Predicated region
      $region49: #{tpu_custom_call.1} parent=5 // pred_check
        _
      $region50: #{tpu_custom_call.1} parent=5 // pred_check_branch
        %313 = sbr.rel (%p310) target = $region52
      $region51: #{tpu_custom_call.1} parent=5 // pred_region
        %s314 = ssub.s32 %s21, 1
        %s315 = sand.u32 %s34, 1
        %s316 = scalar_lea.sflag [#allocation5], %s315
        %s317 = sand.u32 %s34, 1
        %s318 = smul.addr %s317, 2
        %s319 = scalar_lea.vmem [#allocation4], %s318
        // Predicated region
        $region53: #{tpu_custom_call.1} parent=51 // pred_check
          %p320 = pneg %p47
        $region54: #{tpu_custom_call.1} parent=51 // pred_check_branch
          %322 = sbr.rel (%p320) target = $region56
        $region55: #{tpu_custom_call.1} parent=51 // pred_region
          %323 = dma.done %s316, 32
        $region56: #{tpu_custom_call.1} parent=51 // pred_fallthru
          _
        // Predicated region
        $region57: #{tpu_custom_call.1} parent=51 // pred_check
          %p324 = pneg %p94
        $region58: #{tpu_custom_call.1} parent=51 // pred_check_branch
          %326 = sbr.rel (%p324) target = $region60
        $region59: #{tpu_custom_call.1} parent=51 // pred_region
          %327 = dma.done [#allocation8], 2048
        $region60: #{tpu_custom_call.1} parent=51 // pred_fallthru
          _
        // Predicated region
        $region61: #{tpu_custom_call.1} parent=51 // pred_check
          %p328 = pneg %p115
        $region62: #{tpu_custom_call.1} parent=51 // pred_check_branch
          %330 = sbr.rel (%p328) target = $region64
        $region63: #{tpu_custom_call.1} parent=51 // pred_region
          %331 = dma.done [#allocation8], 512
        $region64: #{tpu_custom_call.1} parent=51 // pred_fallthru
          _
        %s332 = sand.u32 %s34, 1
        %s333 = scalar_lea.sflag [#allocation5], %s332
        %s334 = sand.u32 %s34, 1
        %s335 = smul.addr %s334, 2
        %s336 = scalar_lea.vmem [#allocation4], %s335
        %p337 = pneg %p47
        %p338 = pneg %p44
        %p339 = scmp.lt.s32.totalorder %s26, 1
        %s340 = scalar_select %p339, %s26, 1
        %s341 = smul.addr %s340, 2
        %s342 = smul.addr %s341, 2
        %s343 = scalar_lea.vmem %s1, %s342
        %p344 = pneg %p73
        %p345 = pneg %p70
        %p346 = pneg %p94
        %p347 = pneg %p91
        %p348 = pneg %p115
        %p349 = pneg %p112
        %p350 = pneg %p136
        %p351 = pneg %p133
        %p352 = pneg %p157
        %p353 = pneg %p154
        %p354 = pneg %p178
        %p355 = pneg %p175
        %p356 = pneg %p199
        %p357 = pneg %p196
        %p358 = pneg %p225
        %p359 = pneg %p222
        %s360 = sand.u32 %s212, 1
        %s361 = scalar_lea.sflag [#allocation6], %s360
        %s362 = sand.u32 %s212, 1
        %s363 = smul.addr %s362, 16
        %s364 = scalar_lea.vmem [#allocation10], %s363
        %p365 = scmp.lt.s32.totalorder %s26, 1
        %s366 = scalar_select %p365, %s26, 1
        %s367 = smul.addr %s366, 2
        %s368 = smul.addr %s367, 2
        %s369 = scalar_lea.vmem %s1, %s368
        %v370 = vld [vmem:[%s319] sm:$0x3]
        %v371 = vld [vmem:[#allocation7] sm:$0xff]
        %v372 = vld [vmem:[#allocation7 + $0x8] sm:$0xff]
        %v373 = vld [vmem:[#allocation7 + $0x10] sm:$0xff]
        %v374 = vld [vmem:[#allocation7 + $0x18] sm:$0xff]
        %v375 = vld [vmem:[#allocation7 + $0x20] sm:$0xff]
        %v376 = vld [vmem:[#allocation7 + $0x28] sm:$0xff]
        %v377 = vld [vmem:[#allocation7 + $0x30] sm:$0xff]
        %v378 = vld [vmem:[#allocation7 + $0x38] sm:$0xff]
        %v379 = vld [vmem:[#allocation7 + $0x40] sm:$0xff]
        %v380 = vld [vmem:[#allocation7 + $0x48] sm:$0xff]
        %v381 = vld [vmem:[#allocation7 + $0x50] sm:$0xff]
        %v382 = vld [vmem:[#allocation7 + $0x58] sm:$0xff]
        %v383 = vld [vmem:[#allocation7 + $0x60] sm:$0xff]
        %v384 = vld [vmem:[#allocation7 + $0x68] sm:$0xff]
        %v385 = vld [vmem:[#allocation7 + $0x70] sm:$0xff]
        %v386 = vld [vmem:[#allocation7 + $0x78] sm:$0xff]
        %vm387 = vcmask 523264
        %v389 = vsel %vm387, %v370, 0
        %391 = vmatprep.subr.mxu0 %v372
        %392 = vmatpush1.msra.mxu0 %v371
        %393 = vmatprep.subr.mxu0 %v374
        %394 = vmatpush1.msra.mxu0 %v373
        %395 = vmatprep.subr.mxu0 %v376
        %396 = vmatpush1.msra.mxu0 %v375
        %397 = vmatprep.subr.mxu0 %v378
        %398 = vmatpush1.msra.mxu0 %v377
        %399 = vmatprep.subr.mxu0 %v380
        %400 = vmatpush1.msra.mxu0 %v379
        %401 = vmatprep.subr.mxu0 %v382
        %402 = vmatpush1.msra.mxu0 %v381
        %403 = vmatprep.subr.mxu0 %v384
        %404 = vmatpush1.msra.mxu0 %v383
        %405 = vmatprep.subr.mxu0 %v386
        %406 = vmatpush1.msra.mxu0 %v385
        %407 = vmatprep.subr.mxu0 0.0
        %408 = vmatpush1.msra.mxu0 0.0
        %409 = vmatprep.subr.mxu0 0.0
        %410 = vmatpush1.msra.mxu0 0.0
        %411 = vmatprep.subr.mxu0 0.0
        %412 = vmatpush1.msra.mxu0 0.0
        %413 = vmatprep.subr.mxu0 0.0
        %414 = vmatpush1.msra.mxu0 0.0
        %415 = vmatprep.subr.mxu0 0.0
        %416 = vmatpush1.msra.mxu0 0.0
        %417 = vmatprep.subr.mxu0 0.0
        %418 = vmatpush1.msra.mxu0 0.0
        %419 = vmatprep.subr.mxu0 0.0
        %420 = vmatpush1.msra.mxu0 0.0
        %421 = vmatprep.subr.mxu0 0.0
        %422 = vmatpush1.msra.mxu0 0.0
        %423 = vmatprep.subr.mxu0 0.0
        %424 = vmatpush1.msra.mxu0 0.0
        %425 = vmatprep.subr.mxu0 0.0
        %426 = vmatpush1.msra.mxu0 0.0
        %427 = vmatprep.subr.mxu0 0.0
        %428 = vmatpush1.msra.mxu0 0.0
        %429 = vmatprep.subr.mxu0 0.0
        %430 = vmatpush1.msra.mxu0 0.0
        %431 = vmatprep.subr.mxu0 0.0
        %432 = vmatpush1.msra.mxu0 0.0
        %433 = vmatprep.subr.mxu0 0.0
        %434 = vmatpush1.msra.mxu0 0.0
        %435 = vmatprep.subr.mxu0 0.0
        %436 = vmatpush1.msra.mxu0 0.0
        %437 = vmatprep.subr.mxu0 0.0
        %438 = vmatpush1.msra.mxu0 0.0
        %439 = vmatprep.subr.mxu0 0.0
        %440 = vmatpush1.msra.mxu0 0.0
        %441 = vmatprep.subr.mxu0 0.0
        %442 = vmatpush1.msra.mxu0 0.0
        %443 = vmatprep.subr.mxu0 0.0
        %444 = vmatpush1.msra.mxu0 0.0
        %445 = vmatprep.subr.mxu0 0.0
        %446 = vmatpush1.msra.mxu0 0.0
        %447 = vmatprep.subr.mxu0 0.0
        %448 = vmatpush1.msra.mxu0 0.0
        %449 = vmatprep.subr.mxu0 0.0
        %450 = vmatpush1.msra.mxu0 0.0
        %451 = vmatprep.subr.mxu0 0.0
        %452 = vmatpush1.msra.mxu0 0.0
        %453 = vmatprep.subr.mxu0 0.0
        %454 = vmatpush1.msra.mxu0 0.0
        %455 = vmatprep.mubr.f32.mxu0 0.0
        %456 = vmatmul.mubr.f32.gmra.mrb[0].mxu0 %v389
        %v457 = vpop.f32.mrb[0].mxu0
        %v458 = vadd.f32 0.0, %v457
        %v459 = vpop.f32.mrb[0].mxu0
        %v460 = vadd.f32 0.0, %v459
        %461 = vdwg.mxu0
        %v462 = vld [vmem:[%s369] sm:$0xf]
        %v463 = vld [vmem:[#allocation9] ss:$8 sm:$0x3]
        %v466 = vunpack.c.l.s4 1983009808
        %v467 = vunpack.c.0.s8 %v466
        %v468 = vlaneseq
        %v469 = vshrl.u32 %v468, 7
        %v470 = vsub.s32 %v467, %v469
        %v471 = vrot.slane %v462, %v470
        %v472 = vcombine.high %v471, %v471
        %475 = vrot.lane.b32.xlu0 %v471, 17
        %v476 = vpop.permute.xlu0 %475
        %477 = vrot.lane.b32.xlu0 %v472, 17
        %v478 = vpop.permute.xlu0 %477
        %v479 = vlaneseq
        %v480 = vand.u32 %v479, 127
        %vm481 = vcmp.lt.s32.totalorder %v480, 17
        %v482 = vsel %vm481, %v476, %v478
        %v483 = vsel %vm481, %v478, %v476
        %484 = vrot.lane.b32.xlu0 %v458, 17
        %v485 = vpop.permute.xlu0 %484
        %486 = vrot.lane.b32.xlu0 %v460, 17
        %v487 = vpop.permute.xlu0 %486
        %v488 = vsel %vm481, %v485, %v487
        %v489 = vsel %vm481, %v487, %v485
        %v491 = vlaneseq
        %v492 = vshrl.u32 %v491, 7
        %v493 = vsub.s32 0, %v492
        %v494 = vrot.slane %v463, %v493
        %v495 = vlaneseq
        %v496 = vshrl.u32 %v495, 7
        %v497 = vsub.s32 1, %v496
        %v498 = vrot.slane %v463, %v497
        %v501 = vmul.f32 %v483, %v494
        %v502 = vmul.f32 %v482, %v498
        %503 = vst [vmem:[#allocation2] sm:$0x3] %v501
        %504 = vst [vmem:[#allocation2 + $0x8] sm:$0x3] %v502
        %v505 = vmul.f32 %v489, %v494
        %v506 = vmul.f32 %v488, %v498
        %v509 = vrot.slane %v505, 6
        %v510 = vrot.slane %v506, 6
        %513 = vst [vmem:[#allocation2] sm:$0xc] %v509
        %514 = vst [vmem:[#allocation2 + $0x8] sm:$0xc] %v510
        %s515 = scalar_lea.vmem [#allocation9], 1
        %v516 = vld [vmem:[%s515] ss:$8 sm:$0x3]
        %517 = vrot.lane.b32.xlu0 %v471, 16
        %v518 = vpop.permute.xlu0 %517
        %519 = vrot.lane.b32.xlu0 %v472, 16
        %v520 = vpop.permute.xlu0 %519
        %vm521 = vcmp.lt.s32.totalorder %v480, 16
        %v522 = vsel %vm521, %v518, %v520
        %v523 = vsel %vm521, %v520, %v518
        %524 = vrot.lane.b32.xlu0 %v458, 16
        %v525 = vpop.permute.xlu0 %524
        %526 = vrot.lane.b32.xlu0 %v460, 16
        %v527 = vpop.permute.xlu0 %526
        %v528 = vsel %vm521, %v525, %v527
        %v529 = vsel %vm521, %v527, %v525
        %v531 = vlaneseq
        %v532 = vshrl.u32 %v531, 7
        %v533 = vsub.s32 0, %v532
        %v534 = vrot.slane %v516, %v533
        %v535 = vlaneseq
        %v536 = vshrl.u32 %v535, 7
        %v537 = vsub.s32 1, %v536
        %v538 = vrot.slane %v516, %v537
        %v541 = vmul.f32 %v523, %v534
        %v542 = vmul.f32 %v522, %v538
        %v545 = vrot.slane %v541, 4
        %v546 = vrot.slane %v542, 4
        %549 = vst [vmem:[#allocation2] sm:$0x30] %v545
        %550 = vst [vmem:[#allocation2 + $0x8] sm:$0x30] %v546
        %v551 = vmul.f32 %v529, %v534
        %v552 = vmul.f32 %v528, %v538
        %v555 = vrot.slane %v551, 2
        %v556 = vrot.slane %v552, 2
        %559 = vst [vmem:[#allocation2] sm:$0xc0] %v555
        %560 = vst [vmem:[#allocation2 + $0x8] sm:$0xc0] %v556
        %s561 = scalar_lea.vmem [#allocation9], 2
        %v562 = vld [vmem:[%s561] ss:$8 sm:$0x3]
        %563 = vrot.lane.b32.xlu0 %v471, 15
        %v564 = vpop.permute.xlu0 %563
        %565 = vrot.lane.b32.xlu0 %v472, 15
        %v566 = vpop.permute.xlu0 %565
        %vm567 = vcmp.lt.s32.totalorder %v480, 15
        %v568 = vsel %vm567, %v564, %v566
        %v569 = vsel %vm567, %v566, %v564
        %570 = vrot.lane.b32.xlu0 %v458, 15
        %v571 = vpop.permute.xlu0 %570
        %572 = vrot.lane.b32.xlu0 %v460, 15
        %v573 = vpop.permute.xlu0 %572
        %v574 = vsel %vm567, %v571, %v573
        %v575 = vsel %vm567, %v573, %v571
        %v577 = vlaneseq
        %v578 = vshrl.u32 %v577, 7
        %v579 = vsub.s32 0, %v578
        %v580 = vrot.slane %v562, %v579
        %v581 = vlaneseq
        %v582 = vshrl.u32 %v581, 7
        %v583 = vsub.s32 1, %v582
        %v584 = vrot.slane %v562, %v583
        %v587 = vmul.f32 %v569, %v580
        %v588 = vmul.f32 %v568, %v584
        %589 = vst [vmem:[#allocation2 + $0x10] sm:$0x3] %v587
        %590 = vst [vmem:[#allocation2 + $0x18] sm:$0x3] %v588
        %v591 = vmul.f32 %v575, %v580
        %v592 = vmul.f32 %v574, %v584
        %v595 = vrot.slane %v591, 6
        %v596 = vrot.slane %v592, 6
        %599 = vst [vmem:[#allocation2 + $0x10] sm:$0xc] %v595
        %600 = vst [vmem:[#allocation2 + $0x18] sm:$0xc] %v596
        %s601 = scalar_lea.vmem [#allocation9], 3
        %v602 = vld [vmem:[%s601] ss:$8 sm:$0x3]
        %603 = vrot.lane.b32.xlu0 %v471, 1
        %v604 = vpop.permute.xlu0 %603
        %605 = vrot.lane.b32.xlu0 %v472, 1
        %v606 = vpop.permute.xlu0 %605
        %vm607 = vcmp.lt.s32.totalorder %v480, 1
        %v608 = vsel %vm607, %v604, %v606
        %v609 = vsel %vm607, %v606, %v604
        %610 = vrot.lane.b32.xlu0 %v458, 1
        %v611 = vpop.permute.xlu0 %610
        %612 = vrot.lane.b32.xlu0 %v460, 1
        %v613 = vpop.permute.xlu0 %612
        %v614 = vsel %vm607, %v611, %v613
        %v615 = vsel %vm607, %v613, %v611
        %v617 = vlaneseq
        %v618 = vshrl.u32 %v617, 7
        %v619 = vsub.s32 0, %v618
        %v620 = vrot.slane %v602, %v619
        %v621 = vlaneseq
        %v622 = vshrl.u32 %v621, 7
        %v623 = vsub.s32 1, %v622
        %v624 = vrot.slane %v602, %v623
        %v627 = vmul.f32 %v609, %v620
        %v628 = vmul.f32 %v608, %v624
        %v631 = vrot.slane %v627, 4
        %v632 = vrot.slane %v628, 4
        %635 = vst [vmem:[#allocation2 + $0x10] sm:$0x30] %v631
        %636 = vst [vmem:[#allocation2 + $0x18] sm:$0x30] %v632
        %v637 = vmul.f32 %v615, %v620
        %v638 = vmul.f32 %v614, %v624
        %v641 = vrot.slane %v637, 2
        %v642 = vrot.slane %v638, 2
        %645 = vst [vmem:[#allocation2 + $0x10] sm:$0xc0] %v641
        %646 = vst [vmem:[#allocation2 + $0x18] sm:$0xc0] %v642
        %s647 = scalar_lea.vmem [#allocation9], 4
        %v648 = vld [vmem:[%s647] ss:$8 sm:$0x3]
        %v650 = vlaneseq
        %v651 = vshrl.u32 %v650, 7
        %v652 = vsub.s32 0, %v651
        %v653 = vrot.slane %v648, %v652
        %v654 = vlaneseq
        %v655 = vshrl.u32 %v654, 7
        %v656 = vsub.s32 1, %v655
        %v657 = vrot.slane %v648, %v656
        %v660 = vcombine.low %v653, %v657
        %v662 = vunpack.c.l.s4 1983009808
        %v663 = vunpack.c.0.s8 %v662
        %v664 = vlaneseq
        %v665 = vshrl.u32 %v664, 7
        %v666 = vsub.s32 %v663, %v665
        %v667 = vrot.slane %v660, %v666
        %v669 = vmul.f32 %v462, %v667
        %v672 = vunpack.c.l.s4 1983009808
        %v673 = vunpack.c.0.s8 %v672
        %v674 = vlaneseq
        %v675 = vshrl.u32 %v674, 7
        %v676 = vsub.s32 %v673, %v675
        %v677 = vrot.slane %v669, %v676
        %v678 = vcombine.high %v677, %v677
        %681 = vst [vmem:[#allocation2 + $0x20] sm:$0x3] %v677
        %682 = vst [vmem:[#allocation2 + $0x28] sm:$0x3] %v678
        %v683 = vmul.f32 %v458, %v653
        %v684 = vmul.f32 %v460, %v657
        %v687 = vrot.slane %v683, 6
        %v688 = vrot.slane %v684, 6
        %691 = vst [vmem:[#allocation2 + $0x20] sm:$0xc] %v687
        %692 = vst [vmem:[#allocation2 + $0x28] sm:$0xc] %v688
        %s693 = scalar_lea.vmem [#allocation9], 5
        %v694 = vld [vmem:[%s693] ss:$8 sm:$0x3]
        %695 = vrot.lane.b32.xlu0 %v471, 127
        %v696 = vpop.permute.xlu0 %695
        %697 = vrot.lane.b32.xlu0 %v472, 127
        %v698 = vpop.permute.xlu0 %697
        %vm699 = vcmp.lt.s32.totalorder %v480, 127
        %v700 = vsel %vm699, %v696, %v698
        %v701 = vsel %vm699, %v698, %v696
        %702 = vrot.lane.b32.xlu0 %v458, 127
        %v703 = vpop.permute.xlu0 %702
        %704 = vrot.lane.b32.xlu0 %v460, 127
        %v705 = vpop.permute.xlu0 %704
        %v706 = vsel %vm699, %v703, %v705
        %v707 = vsel %vm699, %v705, %v703
        %v709 = vlaneseq
        %v710 = vshrl.u32 %v709, 7
        %v711 = vsub.s32 0, %v710
        %v712 = vrot.slane %v694, %v711
        %v713 = vlaneseq
        %v714 = vshrl.u32 %v713, 7
        %v715 = vsub.s32 1, %v714
        %v716 = vrot.slane %v694, %v715
        %v719 = vmul.f32 %v700, %v712
        %v720 = vmul.f32 %v701, %v716
        %v723 = vrot.slane %v719, 4
        %v724 = vrot.slane %v720, 4
        %727 = vst [vmem:[#allocation2 + $0x20] sm:$0x30] %v723
        %728 = vst [vmem:[#allocation2 + $0x28] sm:$0x30] %v724
        %v729 = vmul.f32 %v706, %v712
        %v730 = vmul.f32 %v707, %v716
        %v733 = vrot.slane %v729, 2
        %v734 = vrot.slane %v730, 2
        %737 = vst [vmem:[#allocation2 + $0x20] sm:$0xc0] %v733
        %738 = vst [vmem:[#allocation2 + $0x28] sm:$0xc0] %v734
        %s739 = scalar_lea.vmem [#allocation9], 6
        %v740 = vld [vmem:[%s739] ss:$8 sm:$0x3]
        %741 = vrot.lane.b32.xlu0 %v471, 113
        %v742 = vpop.permute.xlu0 %741
        %743 = vrot.lane.b32.xlu0 %v472, 113
        %v744 = vpop.permute.xlu0 %743
        %vm745 = vcmp.lt.s32.totalorder %v480, 113
        %v746 = vsel %vm745, %v742, %v744
        %v747 = vsel %vm745, %v744, %v742
        %748 = vrot.lane.b32.xlu0 %v458, 113
        %v749 = vpop.permute.xlu0 %748
        %750 = vrot.lane.b32.xlu0 %v460, 113
        %v751 = vpop.permute.xlu0 %750
        %v752 = vsel %vm745, %v749, %v751
        %v753 = vsel %vm745, %v751, %v749
        %v755 = vlaneseq
        %v756 = vshrl.u32 %v755, 7
        %v757 = vsub.s32 0, %v756
        %v758 = vrot.slane %v740, %v757
        %v759 = vlaneseq
        %v760 = vshrl.u32 %v759, 7
        %v761 = vsub.s32 1, %v760
        %v762 = vrot.slane %v740, %v761
        %v765 = vmul.f32 %v746, %v758
        %v766 = vmul.f32 %v747, %v762
        %767 = vst [vmem:[#allocation2 + $0x30] sm:$0x3] %v765
        %768 = vst [vmem:[#allocation2 + $0x38] sm:$0x3] %v766
        %v769 = vmul.f32 %v752, %v758
        %v770 = vmul.f32 %v753, %v762
        %v773 = vrot.slane %v769, 6
        %v774 = vrot.slane %v770, 6
        %777 = vst [vmem:[#allocation2 + $0x30] sm:$0xc] %v773
        %778 = vst [vmem:[#allocation2 + $0x38] sm:$0xc] %v774
        %s779 = scalar_lea.vmem [#allocation9], 7
        %v780 = vld [vmem:[%s779] ss:$8 sm:$0x3]
        %781 = vrot.lane.b32.xlu0 %v471, 112
        %v782 = vpop.permute.xlu0 %781
        %783 = vrot.lane.b32.xlu0 %v472, 112
        %v784 = vpop.permute.xlu0 %783
        %vm785 = vcmp.lt.s32.totalorder %v480, 112
        %v786 = vsel %vm785, %v782, %v784
        %v787 = vsel %vm785, %v784, %v782
        %788 = vrot.lane.b32.xlu0 %v458, 112
        %v789 = vpop.permute.xlu0 %788
        %790 = vrot.lane.b32.xlu0 %v460, 112
        %v791 = vpop.permute.xlu0 %790
        %v792 = vsel %vm785, %v789, %v791
        %v793 = vsel %vm785, %v791, %v789
        %v795 = vlaneseq
        %v796 = vshrl.u32 %v795, 7
        %v797 = vsub.s32 0, %v796
        %v798 = vrot.slane %v780, %v797
        %v799 = vlaneseq
        %v800 = vshrl.u32 %v799, 7
        %v801 = vsub.s32 1, %v800
        %v802 = vrot.slane %v780, %v801
        %v805 = vmul.f32 %v786, %v798
        %v806 = vmul.f32 %v787, %v802
        %v809 = vrot.slane %v805, 4
        %v810 = vrot.slane %v806, 4
        %813 = vst [vmem:[#allocation2 + $0x30] sm:$0x30] %v809
        %814 = vst [vmem:[#allocation2 + $0x38] sm:$0x30] %v810
        %v815 = vmul.f32 %v792, %v798
        %v816 = vmul.f32 %v793, %v802
        %v819 = vrot.slane %v815, 2
        %v820 = vrot.slane %v816, 2
        %823 = vst [vmem:[#allocation2 + $0x30] sm:$0xc0] %v819
        %824 = vst [vmem:[#allocation2 + $0x38] sm:$0xc0] %v820
        %s825 = scalar_lea.vmem [#allocation9], 16
        %v826 = vld [vmem:[%s825] ss:$8 sm:$0x3]
        %827 = vrot.lane.b32.xlu0 %v471, 111
        %v828 = vpop.permute.xlu0 %827
        %829 = vrot.lane.b32.xlu0 %v472, 111
        %v830 = vpop.permute.xlu0 %829
        %vm831 = vcmp.lt.s32.totalorder %v480, 111
        %v832 = vsel %vm831, %v828, %v830
        %v833 = vsel %vm831, %v830, %v828
        %834 = vrot.lane.b32.xlu0 %v458, 111
        %v835 = vpop.permute.xlu0 %834
        %836 = vrot.lane.b32.xlu0 %v460, 111
        %v837 = vpop.permute.xlu0 %836
        %v838 = vsel %vm831, %v835, %v837
        %v839 = vsel %vm831, %v837, %v835
        %v841 = vlaneseq
        %v842 = vshrl.u32 %v841, 7
        %v843 = vsub.s32 0, %v842
        %v844 = vrot.slane %v826, %v843
        %v845 = vlaneseq
        %v846 = vshrl.u32 %v845, 7
        %v847 = vsub.s32 1, %v846
        %v848 = vrot.slane %v826, %v847
        %v851 = vmul.f32 %v832, %v844
        %v852 = vmul.f32 %v833, %v848
        %853 = vst [vmem:[#allocation2 + $0x40] sm:$0x3] %v851
        %854 = vst [vmem:[#allocation2 + $0x48] sm:$0x3] %v852
        %v855 = vmul.f32 %v838, %v844
        %v856 = vmul.f32 %v839, %v848
        %v859 = vrot.slane %v855, 6
        %v860 = vrot.slane %v856, 6
        %863 = vst [vmem:[#allocation2 + $0x40] sm:$0xc] %v859
        %864 = vst [vmem:[#allocation2 + $0x48] sm:$0xc] %v860
        %v865 = vld [vmem:[%s4] sm:$0xf]
        %v866 = vld [vmem:[#allocation2] sm:$0xff]
        %v867 = vld [vmem:[#allocation2 + $0x8] sm:$0xff]
        %v868 = vld [vmem:[#allocation2 + $0x10] sm:$0xff]
        %v869 = vld [vmem:[#allocation2 + $0x18] sm:$0xff]
        %v870 = vld [vmem:[#allocation2 + $0x20] sm:$0xff]
        %v871 = vld [vmem:[#allocation2 + $0x28] sm:$0xff]
        %v872 = vld [vmem:[#allocation2 + $0x30] sm:$0xff]
        %v873 = vld [vmem:[#allocation2 + $0x38] sm:$0xff]
        %v874 = vld [vmem:[#allocation2 + $0x40] sm:$0xf]
        %v875 = vld [vmem:[#allocation2 + $0x48] sm:$0xf]
        %v876 = vld [vmem:[%s5] sm:$0xf]
        %878 = vset.pattern.permute.xlu0 0
        %879 = vperm.xlu0 %878, %v876
        %v880 = vpop.permute.xlu0 %879
        %vm882 = vcmask 293888
        %v884 = vsel %vm882, %v865, 0
        %vm886 = vcmask 1043456
        %v888 = vsel %vm886, %v874, 0
        %v891 = vsel %vm886, %v875, 0
        %893 = vmatprep.subr.mxu0 %v867
        %894 = vmatpush1.msra.mxu0 %v866
        %895 = vmatprep.subr.mxu0 %v869
        %896 = vmatpush1.msra.mxu0 %v868
        %897 = vmatprep.subr.mxu0 %v871
        %898 = vmatpush1.msra.mxu0 %v870
        %899 = vmatprep.subr.mxu0 %v873
        %900 = vmatpush1.msra.mxu0 %v872
        %901 = vmatprep.subr.mxu0 %v891
        %902 = vmatpush1.msra.mxu0 %v888
        %903 = vmatprep.subr.mxu0 0.0
        %904 = vmatpush1.msra.mxu0 0.0
        %905 = vmatprep.subr.mxu0 0.0
        %906 = vmatpush1.msra.mxu0 0.0
        %907 = vmatprep.subr.mxu0 0.0
        %908 = vmatpush1.msra.mxu0 0.0
        %909 = vmatprep.subr.mxu0 0.0
        %910 = vmatpush1.msra.mxu0 0.0
        %911 = vmatprep.subr.mxu0 0.0
        %912 = vmatpush1.msra.mxu0 0.0
        %913 = vmatprep.subr.mxu0 0.0
        %914 = vmatpush1.msra.mxu0 0.0
        %915 = vmatprep.subr.mxu0 0.0
        %916 = vmatpush1.msra.mxu0 0.0
        %917 = vmatprep.subr.mxu0 0.0
        %918 = vmatpush1.msra.mxu0 0.0
        %919 = vmatprep.subr.mxu0 0.0
        %920 = vmatpush1.msra.mxu0 0.0
        %921 = vmatprep.subr.mxu0 0.0
        %922 = vmatpush1.msra.mxu0 0.0
        %923 = vmatprep.subr.mxu0 0.0
        %924 = vmatpush1.msra.mxu0 0.0
        %925 = vmatprep.subr.mxu0 0.0
        %926 = vmatpush1.msra.mxu0 0.0
        %927 = vmatprep.subr.mxu0 0.0
        %928 = vmatpush1.msra.mxu0 0.0
        %929 = vmatprep.subr.mxu0 0.0
        %930 = vmatpush1.msra.mxu0 0.0
        %931 = vmatprep.subr.mxu0 0.0
        %932 = vmatpush1.msra.mxu0 0.0
        %933 = vmatprep.subr.mxu0 0.0
        %934 = vmatpush1.msra.mxu0 0.0
        %935 = vmatprep.subr.mxu0 0.0
        %936 = vmatpush1.msra.mxu0 0.0
        %937 = vmatprep.subr.mxu0 0.0
        %938 = vmatpush1.msra.mxu0 0.0
        %939 = vmatprep.subr.mxu0 0.0
        %940 = vmatpush1.msra.mxu0 0.0
        %941 = vmatprep.subr.mxu0 0.0
        %942 = vmatpush1.msra.mxu0 0.0
        %943 = vmatprep.subr.mxu0 0.0
        %944 = vmatpush1.msra.mxu0 0.0
        %945 = vmatprep.subr.mxu0 0.0
        %946 = vmatpush1.msra.mxu0 0.0
        %947 = vmatprep.subr.mxu0 0.0
        %948 = vmatpush1.msra.mxu0 0.0
        %949 = vmatprep.subr.mxu0 0.0
        %950 = vmatpush1.msra.mxu0 0.0
        %951 = vmatprep.subr.mxu0 0.0
        %952 = vmatpush1.msra.mxu0 0.0
        %953 = vmatprep.subr.mxu0 0.0
        %954 = vmatpush1.msra.mxu0 0.0
        %955 = vmatprep.subr.mxu0 0.0
        %956 = vmatpush1.msra.mxu0 0.0
        %957 = vmatprep.mubr.f32.mxu0 0.0
        %958 = vmatmul.mubr.f32.gmra.mrb[0].mxu0 %v884
        %v959 = vpop.f32.mrb[0].mxu0
        %v960 = vadd.f32 %v880, %v959
        %v961 = vpop.f32.mrb[0].mxu0
        %v962 = vadd.f32 %v880, %v961
        %963 = vdwg.mxu0
        %v964 = vmax.f32 %v960, 0.0
        %v965 = vmax.f32 %v962, 0.0
        %v966 = vld [vmem:[#allocation9] ss:$8 sm:$0x3]
        %967 = vrot.lane.b32.xlu0 %v964, 17
        %v968 = vpop.permute.xlu0 %967
        %969 = vrot.lane.b32.xlu0 %v965, 17
        %v970 = vpop.permute.xlu0 %969
        %v971 = vsel %vm481, %v968, %v970
        %v972 = vsel %vm481, %v970, %v968
        %v974 = vlaneseq
        %v975 = vshrl.u32 %v974, 7
        %v976 = vsub.s32 0, %v975
        %v977 = vrot.slane %v966, %v976
        %v978 = vlaneseq
        %v979 = vshrl.u32 %v978, 7
        %v980 = vsub.s32 1, %v979
        %v981 = vrot.slane %v966, %v980
        %v984 = vmul.f32 %v972, %v977
        %v985 = vmul.f32 %v971, %v981
        %986 = vst [vmem:[#allocation3] sm:$0xf] %v984
        %987 = vst [vmem:[#allocation3 + $0x8] sm:$0xf] %v985
        %v988 = vld [vmem:[%s515] ss:$8 sm:$0x3]
        %989 = vrot.lane.b32.xlu0 %v964, 16
        %v990 = vpop.permute.xlu0 %989
        %991 = vrot.lane.b32.xlu0 %v965, 16
        %v992 = vpop.permute.xlu0 %991
        %v993 = vsel %vm521, %v990, %v992
        %v994 = vsel %vm521, %v992, %v990
        %v996 = vlaneseq
        %v997 = vshrl.u32 %v996, 7
        %v998 = vsub.s32 0, %v997
        %v999 = vrot.slane %v988, %v998
        %v1000 = vlaneseq
        %v1001 = vshrl.u32 %v1000, 7
        %v1002 = vsub.s32 1, %v1001
        %v1003 = vrot.slane %v988, %v1002
        %v1006 = vmul.f32 %v994, %v999
        %v1007 = vmul.f32 %v993, %v1003
        %v1010 = vrot.slane %v1006, 4
        %v1011 = vrot.slane %v1007, 4
        %1014 = vst [vmem:[#allocation3] sm:$0xf0] %v1010
        %1015 = vst [vmem:[#allocation3 + $0x8] sm:$0xf0] %v1011
        %v1016 = vld [vmem:[%s561] ss:$8 sm:$0x3]
        %1017 = vrot.lane.b32.xlu0 %v964, 15
        %v1018 = vpop.permute.xlu0 %1017
        %1019 = vrot.lane.b32.xlu0 %v965, 15
        %v1020 = vpop.permute.xlu0 %1019
        %v1021 = vsel %vm567, %v1018, %v1020
        %v1022 = vsel %vm567, %v1020, %v1018
        %v1024 = vlaneseq
        %v1025 = vshrl.u32 %v1024, 7
        %v1026 = vsub.s32 0, %v1025
        %v1027 = vrot.slane %v1016, %v1026
        %v1028 = vlaneseq
        %v1029 = vshrl.u32 %v1028, 7
        %v1030 = vsub.s32 1, %v1029
        %v1031 = vrot.slane %v1016, %v1030
        %v1034 = vmul.f32 %v1022, %v1027
        %v1035 = vmul.f32 %v1021, %v1031
        %1036 = vst [vmem:[#allocation3 + $0x10] sm:$0xf] %v1034
        %1037 = vst [vmem:[#allocation3 + $0x18] sm:$0xf] %v1035
        %v1038 = vld [vmem:[%s601] ss:$8 sm:$0x3]
        %1039 = vrot.lane.b32.xlu0 %v964, 1
        %v1040 = vpop.permute.xlu0 %1039
        %1041 = vrot.lane.b32.xlu0 %v965, 1
        %v1042 = vpop.permute.xlu0 %1041
        %v1043 = vsel %vm607, %v1040, %v1042
        %v1044 = vsel %vm607, %v1042, %v1040
        %v1046 = vlaneseq
        %v1047 = vshrl.u32 %v1046, 7
        %v1048 = vsub.s32 0, %v1047
        %v1049 = vrot.slane %v1038, %v1048
        %v1050 = vlaneseq
        %v1051 = vshrl.u32 %v1050, 7
        %v1052 = vsub.s32 1, %v1051
        %v1053 = vrot.slane %v1038, %v1052
        %v1056 = vmul.f32 %v1044, %v1049
        %v1057 = vmul.f32 %v1043, %v1053
        %v1060 = vrot.slane %v1056, 4
        %v1061 = vrot.slane %v1057, 4
        %1064 = vst [vmem:[#allocation3 + $0x10] sm:$0xf0] %v1060
        %1065 = vst [vmem:[#allocation3 + $0x18] sm:$0xf0] %v1061
        %v1066 = vld [vmem:[%s647] ss:$8 sm:$0x3]
        %v1068 = vlaneseq
        %v1069 = vshrl.u32 %v1068, 7
        %v1070 = vsub.s32 0, %v1069
        %v1071 = vrot.slane %v1066, %v1070
        %v1072 = vlaneseq
        %v1073 = vshrl.u32 %v1072, 7
        %v1074 = vsub.s32 1, %v1073
        %v1075 = vrot.slane %v1066, %v1074
        %v1078 = vmul.f32 %v964, %v1071
        %v1079 = vmul.f32 %v965, %v1075
        %1080 = vst [vmem:[#allocation3 + $0x20] sm:$0xf] %v1078
        %1081 = vst [vmem:[#allocation3 + $0x28] sm:$0xf] %v1079
        %v1082 = vld [vmem:[%s693] ss:$8 sm:$0x3]
        %1083 = vrot.lane.b32.xlu0 %v964, 127
        %v1084 = vpop.permute.xlu0 %1083
        %1085 = vrot.lane.b32.xlu0 %v965, 127
        %v1086 = vpop.permute.xlu0 %1085
        %v1087 = vsel %vm699, %v1084, %v1086
        %v1088 = vsel %vm699, %v1086, %v1084
        %v1090 = vlaneseq
        %v1091 = vshrl.u32 %v1090, 7
        %v1092 = vsub.s32 0, %v1091
        %v1093 = vrot.slane %v1082, %v1092
        %v1094 = vlaneseq
        %v1095 = vshrl.u32 %v1094, 7
        %v1096 = vsub.s32 1, %v1095
        %v1097 = vrot.slane %v1082, %v1096
        %v1100 = vmul.f32 %v1087, %v1093
        %v1101 = vmul.f32 %v1088, %v1097
        %v1104 = vrot.slane %v1100, 4
        %v1105 = vrot.slane %v1101, 4
        %1108 = vst [vmem:[#allocation3 + $0x20] sm:$0xf0] %v1104
        %1109 = vst [vmem:[#allocation3 + $0x28] sm:$0xf0] %v1105
        %v1110 = vld [vmem:[%s739] ss:$8 sm:$0x3]
        %1111 = vrot.lane.b32.xlu0 %v964, 113
        %v1112 = vpop.permute.xlu0 %1111
        %1113 = vrot.lane.b32.xlu0 %v965, 113
        %v1114 = vpop.permute.xlu0 %1113
        %v1115 = vsel %vm745, %v1112, %v1114
        %v1116 = vsel %vm745, %v1114, %v1112
        %v1118 = vlaneseq
        %v1119 = vshrl.u32 %v1118, 7
        %v1120 = vsub.s32 0, %v1119
        %v1121 = vrot.slane %v1110, %v1120
        %v1122 = vlaneseq
        %v1123 = vshrl.u32 %v1122, 7
        %v1124 = vsub.s32 1, %v1123
        %v1125 = vrot.slane %v1110, %v1124
        %v1128 = vmul.f32 %v1115, %v1121
        %v1129 = vmul.f32 %v1116, %v1125
        %1130 = vst [vmem:[#allocation3 + $0x30] sm:$0xf] %v1128
        %1131 = vst [vmem:[#allocation3 + $0x38] sm:$0xf] %v1129
        %v1132 = vld [vmem:[%s779] ss:$8 sm:$0x3]
        %1133 = vrot.lane.b32.xlu0 %v964, 112
        %v1134 = vpop.permute.xlu0 %1133
        %1135 = vrot.lane.b32.xlu0 %v965, 112
        %v1136 = vpop.permute.xlu0 %1135
        %v1137 = vsel %vm785, %v1134, %v1136
        %v1138 = vsel %vm785, %v1136, %v1134
        %v1140 = vlaneseq
        %v1141 = vshrl.u32 %v1140, 7
        %v1142 = vsub.s32 0, %v1141
        %v1143 = vrot.slane %v1132, %v1142
        %v1144 = vlaneseq
        %v1145 = vshrl.u32 %v1144, 7
        %v1146 = vsub.s32 1, %v1145
        %v1147 = vrot.slane %v1132, %v1146
        %v1150 = vmul.f32 %v1137, %v1143
        %v1151 = vmul.f32 %v1138, %v1147
        %v1154 = vrot.slane %v1150, 4
        %v1155 = vrot.slane %v1151, 4
        %1158 = vst [vmem:[#allocation3 + $0x30] sm:$0xf0] %v1154
        %1159 = vst [vmem:[#allocation3 + $0x38] sm:$0xf0] %v1155
        %v1160 = vld [vmem:[%s825] ss:$8 sm:$0x3]
        %1161 = vrot.lane.b32.xlu0 %v964, 111
        %v1162 = vpop.permute.xlu0 %1161
        %1163 = vrot.lane.b32.xlu0 %v965, 111
        %v1164 = vpop.permute.xlu0 %1163
        %v1165 = vsel %vm831, %v1162, %v1164
        %v1166 = vsel %vm831, %v1164, %v1162
        %v1168 = vlaneseq
        %v1169 = vshrl.u32 %v1168, 7
        %v1170 = vsub.s32 0, %v1169
        %v1171 = vrot.slane %v1160, %v1170
        %v1172 = vlaneseq
        %v1173 = vshrl.u32 %v1172, 7
        %v1174 = vsub.s32 1, %v1173
        %v1175 = vrot.slane %v1160, %v1174
        %v1178 = vmul.f32 %v1165, %v1171
        %v1179 = vmul.f32 %v1166, %v1175
        %1180 = vst [vmem:[#allocation3 + $0x40] sm:$0xf] %v1178
        %1181 = vst [vmem:[#allocation3 + $0x48] sm:$0xf] %v1179
        %v1182 = vld [vmem:[%s6] sm:$0xff]
        %v1183 = vld [vmem:[#allocation3] sm:$0xff]
        %v1184 = vld [vmem:[#allocation3 + $0x8] sm:$0xff]
        %v1185 = vld [vmem:[#allocation3 + $0x10] sm:$0xff]
        %v1186 = vld [vmem:[#allocation3 + $0x18] sm:$0xff]
        %v1187 = vld [vmem:[#allocation3 + $0x20] sm:$0xff]
        %v1188 = vld [vmem:[#allocation3 + $0x28] sm:$0xff]
        %v1189 = vld [vmem:[#allocation3 + $0x30] sm:$0xff]
        %v1190 = vld [vmem:[#allocation3 + $0x38] sm:$0xff]
        %v1191 = vld [vmem:[#allocation3 + $0x40] sm:$0xf]
        %v1192 = vld [vmem:[#allocation3 + $0x48] sm:$0xf]
        %v1193 = vld [vmem:[%s7] sm:$0xff]
        %1195 = vset.pattern.permute.xlu0 0
        %1196 = vperm.xlu0 %1195, %v1193
        %v1197 = vpop.permute.xlu0 %1196
        %v1200 = vsel %vm882, %v1182, 0
        %v1203 = vsel %vm886, %v1191, 0
        %v1206 = vsel %vm886, %v1192, 0
        %1208 = vmatprep.subr.mxu0 %v1184
        %1209 = vmatpush1.msra.mxu0 %v1183
        %1210 = vmatprep.subr.mxu0 %v1186
        %1211 = vmatpush1.msra.mxu0 %v1185
        %1212 = vmatprep.subr.mxu0 %v1188
        %1213 = vmatpush1.msra.mxu0 %v1187
        %1214 = vmatprep.subr.mxu0 %v1190
        %1215 = vmatpush1.msra.mxu0 %v1189
        %1216 = vmatprep.subr.mxu0 %v1206
        %1217 = vmatpush1.msra.mxu0 %v1203
        %1218 = vmatprep.subr.mxu0 0.0
        %1219 = vmatpush1.msra.mxu0 0.0
        %1220 = vmatprep.subr.mxu0 0.0
        %1221 = vmatpush1.msra.mxu0 0.0
        %1222 = vmatprep.subr.mxu0 0.0
        %1223 = vmatpush1.msra.mxu0 0.0
        %1224 = vmatprep.subr.mxu0 0.0
        %1225 = vmatpush1.msra.mxu0 0.0
        %1226 = vmatprep.subr.mxu0 0.0
        %1227 = vmatpush1.msra.mxu0 0.0
        %1228 = vmatprep.subr.mxu0 0.0
        %1229 = vmatpush1.msra.mxu0 0.0
        %1230 = vmatprep.subr.mxu0 0.0
        %1231 = vmatpush1.msra.mxu0 0.0
        %1232 = vmatprep.subr.mxu0 0.0
        %1233 = vmatpush1.msra.mxu0 0.0
        %1234 = vmatprep.subr.mxu0 0.0
        %1235 = vmatpush1.msra.mxu0 0.0
        %1236 = vmatprep.subr.mxu0 0.0
        %1237 = vmatpush1.msra.mxu0 0.0
        %1238 = vmatprep.subr.mxu0 0.0
        %1239 = vmatpush1.msra.mxu0 0.0
        %1240 = vmatprep.subr.mxu0 0.0
        %1241 = vmatpush1.msra.mxu0 0.0
        %1242 = vmatprep.subr.mxu0 0.0
        %1243 = vmatpush1.msra.mxu0 0.0
        %1244 = vmatprep.subr.mxu0 0.0
        %1245 = vmatpush1.msra.mxu0 0.0
        %1246 = vmatprep.subr.mxu0 0.0
        %1247 = vmatpush1.msra.mxu0 0.0
        %1248 = vmatprep.subr.mxu0 0.0
        %1249 = vmatpush1.msra.mxu0 0.0
        %1250 = vmatprep.subr.mxu0 0.0
        %1251 = vmatpush1.msra.mxu0 0.0
        %1252 = vmatprep.subr.mxu0 0.0
        %1253 = vmatpush1.msra.mxu0 0.0
        %1254 = vmatprep.subr.mxu0 0.0
        %1255 = vmatpush1.msra.mxu0 0.0
        %1256 = vmatprep.subr.mxu0 0.0
        %1257 = vmatpush1.msra.mxu0 0.0
        %1258 = vmatprep.subr.mxu0 0.0
        %1259 = vmatpush1.msra.mxu0 0.0
        %1260 = vmatprep.subr.mxu0 0.0
        %1261 = vmatpush1.msra.mxu0 0.0
        %1262 = vmatprep.subr.mxu0 0.0
        %1263 = vmatpush1.msra.mxu0 0.0
        %1264 = vmatprep.subr.mxu0 0.0
        %1265 = vmatpush1.msra.mxu0 0.0
        %1266 = vmatprep.subr.mxu0 0.0
        %1267 = vmatpush1.msra.mxu0 0.0
        %1268 = vmatprep.subr.mxu0 0.0
        %1269 = vmatpush1.msra.mxu0 0.0
        %1270 = vmatprep.subr.mxu0 0.0
        %1271 = vmatpush1.msra.mxu0 0.0
        %1272 = vmatprep.mubr.f32.mxu0 0.0
        %1273 = vmatmul.mubr.f32.gmra.mrb[0].mxu0 %v1200
        %v1274 = vpop.f32.mrb[0].mxu0
        %v1275 = vadd.f32 %v1197, %v1274
        %v1276 = vpop.f32.mrb[0].mxu0
        %v1277 = vadd.f32 %v1197, %v1276
        %1278 = vdwg.mxu0
        %v1279 = vmax.f32 %v1275, 0.0
        %v1280 = vmax.f32 %v1277, 0.0
        %1281 = vst [vmem:[%s364] sm:$0xff] %v1279
        %1282 = vst [vmem:[%s364 + $0x8] sm:$0xff] %v1280
        %s1283 = sand.u32 %s212, 1
        %s1284 = scalar_lea.sflag [#allocation6], %s1283
        %s1285 = sand.u32 %s212, 1
        %s1286 = smul.addr %s1285, 16
        %s1287 = scalar_lea.vmem [#allocation10], %s1286
        // Predicated region
        $region65: #{tpu_custom_call.1} parent=51 // pred_check
          %p1288 = pneg %p222
        $region66: #{tpu_custom_call.1} parent=51 // pred_check_branch
          %1290 = sbr.rel (%p1288) target = $region68
        $region67: #{tpu_custom_call.1} parent=51 // pred_region
          %s1292 = ssub.s32 256, 256
          %1293 = vsyncadd %s1284, %s1292
          %s1294 = smul.addr %s26, 2
          %s1295 = smul.addr %s1294, 128
          %s1296 = scalar_lea.hbm %s8, %s1295
          %s1298 = sshll.u32 %s1287, 4
          %s1299 = int_to_ptr.vmem [resolvable:$true] %s1298
          %1301 = dma.vmem_to_hbm [thread:$0]  %s1299, 256, %s1296, %s1284
        $region68: #{tpu_custom_call.1} parent=51 // pred_fallthru
          _
      $region52: #{tpu_custom_call.1} parent=5 // pred_fallthru
        _
      %p1302 = scmp.le.s32.totalorder 2, %s21
      // Predicated region
      $region69: #{tpu_custom_call.1} parent=5 // pred_check
        %p1303 = pneg %p1302
      $region70: #{tpu_custom_call.1} parent=5 // pred_check_branch
        %1305 = sbr.rel (%p1303) target = $region72
      $region71: #{tpu_custom_call.1} parent=5 // pred_region
        %s1306 = ssub.s32 %s21, 2
        // Predicated region
        $region73: #{tpu_custom_call.1} parent=71 // pred_check
          %p1307 = pneg %p228
        $region74: #{tpu_custom_call.1} parent=71 // pred_check_branch
          %1309 = sbr.rel (%p1307) target = $region76
        $region75: #{tpu_custom_call.1} parent=71 // pred_region
          %s1310 = sand.u32 %s213, 1
          %s1311 = scalar_lea.sflag [#allocation6], %s1310
          %s1312 = sand.u32 %s213, 1
          %s1313 = smul.addr %s1312, 16
          %s1314 = scalar_lea.vmem [#allocation10], %s1313
          %1315 = dma.done %s1311, 256
        $region76: #{tpu_custom_call.1} parent=71 // pred_fallthru
          _
      $region72: #{tpu_custom_call.1} parent=5 // pred_fallthru
        _
    $region6: #{tpu_custom_call.1} parent=1 // loop_footer
      %s25 = sadd.s32 1, %s21
    $region7: #{tpu_custom_call.1} parent=1 // loop_footer_branch
      %20 = sbr.rel target = $region3
    $region8: #{tpu_custom_call.1} parent=1 // loop_exit
      _
    %1316 = vsyncpa [#allocation5], 1
    %s1317 = scalar_lea.sflag [#allocation5], 1
    %1318 = vsyncpa %s1317, 1
    %1319 = vsyncpa [#allocation8], 1
    %1320 = vsyncpa [#allocation6], 1
    %s1321 = scalar_lea.sflag [#allocation6], 1
    %1322 = vsyncpa %s1321, 1

</llo_original>
